<compile_context>
chip_gen: v7x
topology: tpu7x:2x2x1
jax: 0.10.0
libtpu: 0.0.40
codegen_flags: <defaults>
</compile_context>

<pallas_src>
import functools

import jax
import jax.numpy as jnp
from jax import lax
from jax.experimental import pallas as pl
from jax.experimental.pallas import tpu as pltpu


def _round_up(n, m):
    return ((n + m - 1) // m) * m


def _b_from_vs_kernel(x_ref, t_ref, w1x_ref, w1t_ref, b1_ref,
                      w2_ref, bv2_ref, bs2_ref, out_ref, *, hidden, lane_split):
    """One batch tile of b(x, t) = v(x, t) - gg_dot(t) * s(x, t) (fused)."""
    x = x_ref[...]                                  # (TB, D)  compute dtype
    t = t_ref[...]                                  # (TB, 1)  f32
    gg = t * (1.0 - t)                              # gg_dot(t) = t (1 - t)

    # Layer 1 of both nets in one MXU push:  x @ [Wv1x | Ws1x]  (+ rank-1 t
    # term for the time column, + biases), then ReLU.  f32 accumulation.
    h = jnp.dot(x, w1x_ref[...], preferred_element_type=jnp.float32)
    h = h + t * w1t_ref[...] + b1_ref[...]          # (TB, 2H) f32
    h = jnp.maximum(h, 0.0)

    # Scale the s-half of the hidden activations by -gg_dot(t) so the second
    # matmul accumulates v_out - gg_dot*s_out directly.
    if lane_split:
        # H multiple of 128: static lane-aligned split.  No iota, no select,
        # and the -gg multiply touches only the s-half.  Re-concat at a
        # 128-lane boundary is layout-free, so layer 2 stays one K=2H matmul.
        hv = h[:, :hidden]
        hs = (-gg) * h[:, hidden:]
        h = jnp.concatenate([hv, hs], axis=1)
    else:
        # Fallback for non-lane-aligned H.
        col = lax.broadcasted_iota(jnp.int32, h.shape, 1)
        h = jnp.where(col < hidden, h, -gg * h)

    # Layer 2 (fused combine):  [hv | -gg*hs] @ [Wv2 ; Ws2]
    h = h.astype(w2_ref.dtype)
    y = jnp.dot(h, w2_ref[...], preferred_element_type=jnp.float32)
    y = y + bv2_ref[...] - gg * bs2_ref[...]        # bias:  bv2 - gg*bs2
    out_ref[...] = y.astype(out_ref.dtype)


def pack_params(params, compute_dtype=jnp.bfloat16):
    """Repack per-net weights into the fused layout used by the kernel."""
    (wv1, bv1, wv2, bv2, ws1, bs1, ws2, bs2) = params
    d = wv1.shape[0] - 1
    w1x = jnp.concatenate([wv1[:d], ws1[:d]], axis=1).astype(compute_dtype)          # (D, 2H)
    w1t = jnp.concatenate([wv1[d:d + 1], ws1[d:d + 1]], axis=1).astype(jnp.float32)  # (1, 2H)
    b1 = jnp.concatenate([bv1, bs1], axis=1).astype(jnp.float32)                     # (1, 2H)
    w2 = jnp.concatenate([wv2, ws2], axis=0).astype(compute_dtype)                   # (2H, D)
    return (w1x, w1t, b1, w2, bv2.astype(jnp.float32), bs2.astype(jnp.float32))


def _choose_batch_tile(B, block_b):
    """Largest sublane-aligned batch tile with small padding and grid >= 2.

    Preference order:
      (1) padded-row overhead <= 12.5% (padded rows are full-cost matmul +
          HBM writeback that gets sliced off),
      (2) grid >= 2 (software pipelining + both v7x TensorCores on the
          "parallel" batch axis),
      (3) the largest tile (per-grid-step overhead ~0.35 us dominates small
          tiles; 128-row tiles sit at ~29% of HBM roofline vs ~85% at 512).
    """
    b8 = _round_up(max(B, 1), 8)
    cap = max(8, min(_round_up(block_b, 8), b8))
    best_tb, best_key = 8, None
    tb = 8
    while tb <= cap:
        b_pad = _round_up(b8, tb)
        waste_ok = (b_pad - B) <= 0.125 * B
        grid_ok = (b_pad // tb) >= 2
        key = (waste_ok, grid_ok, tb)
        if best_key is None or key > best_key:
            best_tb, best_key = tb, key
        tb *= 2
    return best_tb


def b_from_vs(x, t, packed, *, block_b=1024, compute_dtype=jnp.bfloat16,
              out_dtype=jnp.float32):
    """x: [B, D], t: [B, 1] -> drift b(x, t): [B, D] (out_dtype)."""
    B, D = x.shape
    (w1x, w1t, b1, w2, bv2, bs2) = packed
    H2 = w1x.shape[1]
    H = H2 // 2
    out_dtype = jnp.dtype(out_dtype)

    tb = _choose_batch_tile(B, block_b)
    B_pad = _round_up(B, tb)

    x_in = x.astype(compute_dtype)
    t_in = t.astype(jnp.float32)
    if B_pad != B:
        x_in = jnp.pad(x_in, ((0, B_pad - B), (0, 0)))
        t_in = jnp.pad(t_in, ((0, B_pad - B), (0, 0)))

    grid = (B_pad // tb,)
    lane_split = (H > 0) and (H % 128 == 0)
    kernel = functools.partial(_b_from_vs_kernel, hidden=H, lane_split=lane_split)

    flops = 2 * B_pad * D * H2 + 2 * B_pad * H2 * D
    weight_bytes = sum(w.size * w.dtype.itemsize
                       for w in (w1x, w1t, b1, w2, bv2, bs2))
    bytes_accessed = (x_in.size * x_in.dtype.itemsize
                      + t_in.size * 4
                      + B_pad * D * out_dtype.itemsize
                      + weight_bytes)

    # VMEM footprint: double-buffered x/t/out streams + (double-buffered)
    # weights.  Only raise the scoped limit when the v5e 16 MiB default would
    # be exceeded; cap at 64 MiB (v7x physical VMEM per TensorCore).
    in_itemsize = jnp.dtype(compute_dtype).itemsize
    tile_bytes = 2 * (tb * D * in_itemsize + tb * 4 + tb * D * out_dtype.itemsize)
    vmem_need = 2 * weight_bytes + tile_bytes
    compiler_kwargs = dict(dimension_semantics=("parallel",))
    if vmem_need > 12 * 1024 * 1024:
        compiler_kwargs["vmem_limit_bytes"] = min(
            _round_up(int(vmem_need * 3 // 2), 1024 * 1024), 64 * 1024 * 1024)

    out = pl.pallas_call(
        kernel,
        out_shape=jax.ShapeDtypeStruct((B_pad, D), out_dtype),
        grid=grid,
        in_specs=[
            pl.BlockSpec((tb, D), lambda i: (i, 0)),    # x   (streamed)
            pl.BlockSpec((tb, 1), lambda i: (i, 0)),    # t   (streamed)
            pl.BlockSpec((D, H2), lambda i: (0, 0)),    # W1x (VMEM-resident)
            pl.BlockSpec((1, H2), lambda i: (0, 0)),    # w1t
            pl.BlockSpec((1, H2), lambda i: (0, 0)),    # b1
            pl.BlockSpec((H2, D), lambda i: (0, 0)),    # W2
            pl.BlockSpec((1, D), lambda i: (0, 0)),     # bv2
            pl.BlockSpec((1, D), lambda i: (0, 0)),     # bs2
        ],
        out_specs=pl.BlockSpec((tb, D), lambda i: (i, 0)),
        compiler_params=pltpu.CompilerParams(**compiler_kwargs),
        cost_estimate=pl.CostEstimate(
            flops=flops, transcendentals=0, bytes_accessed=bytes_accessed),
    )(x_in, t_in, w1x, w1t, b1, w2, bv2, bs2)

    return out[:B] if B_pad != B else out


def init_params(key, d, h):
    """Deterministic synthetic weights for the v and s MLPs (unfused layout)."""
    ks = jax.random.split(key, 8)
    scale_in = 1.0 / jnp.sqrt(d + 1.0)
    scale_h = 1.0 / jnp.sqrt(float(h))
    wv1 = jax.random.normal(ks[0], (d + 1, h), jnp.float32) * scale_in
    bv1 = jax.random.normal(ks[1], (1, h), jnp.float32) * 0.01
    wv2 = jax.random.normal(ks[2], (h, d), jnp.float32) * scale_h
    bv2 = jax.random.normal(ks[3], (1, d), jnp.float32) * 0.01
    ws1 = jax.random.normal(ks[4], (d + 1, h), jnp.float32) * scale_in
    bs1 = jax.random.normal(ks[5], (1, h), jnp.float32) * 0.01
    ws2 = jax.random.normal(ks[6], (h, d), jnp.float32) * scale_h
    bs2 = jax.random.normal(ks[7], (1, d), jnp.float32) * 0.01
    return (wv1, bv1, wv2, bv2, ws1, bs1, ws2, bs2)


def b_from_vs_ref(x, t, params):
    """Pure-JAX reference (unfused, matches the PyTorch module semantics)."""
    (wv1, bv1, wv2, bv2, ws1, bs1, ws2, bs2) = params
    xt = jnp.concatenate([x, t], axis=-1)
    v_out = jnp.maximum(xt @ wv1 + bv1, 0.0) @ wv2 + bv2
    s_out = jnp.maximum(xt @ ws1 + bs1, 0.0) @ ws2 + bs2
    gg_dot = t * (1.0 - t)
    return v_out - gg_dot * s_out


if __name__ == "__main__":
    B, D, H = 512, 128, 128   # lane-aligned feature dims; tile picker -> tb=256, grid=2

    key = jax.random.PRNGKey(0)
    kx, kt, kp = jax.random.split(key, 3)
    x = jax.random.normal(kx, (B, D), jnp.float32)
    t = jax.random.uniform(kt, (B, 1), jnp.float32)
    params = init_params(kp, D, H)
    ref = b_from_vs_ref(x, t, params)

    # f32 MXU path, f32 output: tight check of the fused-kernel algebra.
    out_f32 = b_from_vs(x, t, pack_params(params, jnp.float32),
                        compute_dtype=jnp.float32, out_dtype=jnp.float32)
    out_f32 = jax.block_until_ready(out_f32)
    assert out_f32.shape == (B, D) and out_f32.dtype == jnp.float32
    assert jnp.allclose(out_f32, ref, atol=1e-4, rtol=1e-4), "f32 mismatch"

    # bf16 MXU operands + bf16 output (f32 accumulation): the bandwidth /
    # throughput path; looser tolerance only from bf16 rounding.
    out_bf16 = b_from_vs(x, t, pack_params(params, jnp.bfloat16),
                         compute_dtype=jnp.bfloat16, out_dtype=jnp.bfloat16)
    out_bf16 = jax.block_until_ready(out_bf16)
    assert out_bf16.shape == (B, D) and out_bf16.dtype == jnp.bfloat16
    assert jnp.allclose(out_bf16.astype(jnp.float32), ref,
                        atol=1e-1, rtol=5e-2), "bf16 mismatch"

    print("KERNEL_OK")
</pallas_src>

<mosaic_0001>
module attributes {stable_mosaic.version = 11 : i64} {
  func.func @_b_from_vs_kernel(%arg0: i32, %arg1: memref<256x128xf32, #tpu.memory_space<vmem>>, %arg2: memref<256x1xf32, #tpu.memory_space<vmem>>, %arg3: memref<128x256xf32, #tpu.memory_space<vmem>>, %arg4: memref<1x256xf32, #tpu.memory_space<vmem>>, %arg5: memref<1x256xf32, #tpu.memory_space<vmem>>, %arg6: memref<256x128xf32, #tpu.memory_space<vmem>>, %arg7: memref<1x128xf32, #tpu.memory_space<vmem>>, %arg8: memref<1x128xf32, #tpu.memory_space<vmem>>, %arg9: memref<256x128xf32, #tpu.memory_space<vmem>>) attributes {dimension_semantics = [#tpu.dimension_semantics<parallel>], iteration_bounds = array<i64: 2>, scalar_prefetch = 0 : i64, scratch_operands = 0 : i64, tpu.core_type = #tpu.core_type<tc>, window_params = [{transform_indices = @transform_0, window_bounds = array<i64: 256, 128>}, {transform_indices = @transform_1, window_bounds = array<i64: 256, 1>}, {pipeline_mode = #tpu.pipeline_mode<synchronous>, transform_indices = @transform_2, window_bounds = array<i64: 128, 256>}, {pipeline_mode = #tpu.pipeline_mode<synchronous>, transform_indices = @transform_3, window_bounds = array<i64: 1, 256>}, {pipeline_mode = #tpu.pipeline_mode<synchronous>, transform_indices = @transform_4, window_bounds = array<i64: 1, 256>}, {pipeline_mode = #tpu.pipeline_mode<synchronous>, transform_indices = @transform_5, window_bounds = array<i64: 256, 128>}, {pipeline_mode = #tpu.pipeline_mode<synchronous>, transform_indices = @transform_6, window_bounds = array<i64: 1, 128>}, {pipeline_mode = #tpu.pipeline_mode<synchronous>, transform_indices = @transform_7, window_bounds = array<i64: 1, 128>}, {transform_indices = @transform_8, window_bounds = array<i64: 256, 128>}]} {
    %c0 = arith.constant 0 : index
    %c0_0 = arith.constant 0 : index
    %0 = vector.load %arg1[%c0, %c0_0] : memref<256x128xf32, #tpu.memory_space<vmem>>, vector<256x128xf32>
    %c0_1 = arith.constant 0 : index
    %c0_2 = arith.constant 0 : index
    %1 = vector.load %arg2[%c0_1, %c0_2] : memref<256x1xf32, #tpu.memory_space<vmem>>, vector<256x1xf32>
    %cst = arith.constant 1.000000e+00 : f32
    %2 = vector.broadcast %cst : f32 to vector<256x1xf32>
    %3 = arith.subf %2, %1 : vector<256x1xf32>
    %4 = arith.mulf %1, %3 : vector<256x1xf32>
    %c0_3 = arith.constant 0 : index
    %c0_4 = arith.constant 0 : index
    %5 = vector.load %arg3[%c0_3, %c0_4] : memref<128x256xf32, #tpu.memory_space<vmem>>, vector<128x256xf32>
    %cst_5 = arith.constant dense<0.000000e+00> : vector<256x256xf32>
    %6 = tpu.matmul %0, %5, %cst_5 {dimension_numbers = #tpu.dot_dimension_numbers<[1], [0], [0], [1], [0, 0, 1, 1], [], []>} : vector<256x128xf32>, vector<128x256xf32>, vector<256x256xf32> -> vector<256x256xf32>
    %c0_6 = arith.constant 0 : index
    %c0_7 = arith.constant 0 : index
    %7 = vector.load %arg4[%c0_6, %c0_7] : memref<1x256xf32, #tpu.memory_space<vmem>>, vector<1x256xf32>
    %8 = vector.broadcast %1 : vector<256x1xf32> to vector<256x256xf32>
    %9 = vector.broadcast %7 : vector<1x256xf32> to vector<256x256xf32>
    %10 = arith.mulf %8, %9 : vector<256x256xf32>
    %11 = arith.addf %6, %10 : vector<256x256xf32>
    %c0_8 = arith.constant 0 : index
    %c0_9 = arith.constant 0 : index
    %12 = vector.load %arg5[%c0_8, %c0_9] : memref<1x256xf32, #tpu.memory_space<vmem>>, vector<1x256xf32>
    %13 = vector.broadcast %12 : vector<1x256xf32> to vector<256x256xf32>
    %14 = arith.addf %11, %13 : vector<256x256xf32>
    %cst_10 = arith.constant 0.000000e+00 : f32
    %15 = vector.broadcast %cst_10 : f32 to vector<256x256xf32>
    %16 = arith.maximumf %14, %15 : vector<256x256xf32>
    %17 = vector.extract_strided_slice %16 {offsets = [0, 0], sizes = [256, 128], strides = [1, 1]} : vector<256x256xf32> to vector<256x128xf32>
    %cst_11 = arith.constant 0.000000e+00 : f32
    %18 = vector.broadcast %cst_11 : f32 to vector<256x1xf32>
    %19 = arith.subf %18, %4 : vector<256x1xf32>
    %20 = vector.extract_strided_slice %16 {offsets = [0, 128], sizes = [256, 128], strides = [1, 1]} : vector<256x256xf32> to vector<256x128xf32>
    %21 = vector.broadcast %19 : vector<256x1xf32> to vector<256x128xf32>
    %22 = arith.mulf %21, %20 : vector<256x128xf32>
    %23 = tpu.concatenate %17, %22 in 1 : vector<256x128xf32>, vector<256x128xf32> -> vector<256x256xf32>
    %c0_12 = arith.constant 0 : index
    %c0_13 = arith.constant 0 : index
    %24 = vector.load %arg6[%c0_12, %c0_13] : memref<256x128xf32, #tpu.memory_space<vmem>>, vector<256x128xf32>
    %cst_14 = arith.constant dense<0.000000e+00> : vector<256x128xf32>
    %25 = tpu.matmul %23, %24, %cst_14 {dimension_numbers = #tpu.dot_dimension_numbers<[1], [0], [0], [1], [0, 0, 1, 1], [], []>} : vector<256x256xf32>, vector<256x128xf32>, vector<256x128xf32> -> vector<256x128xf32>
    %c0_15 = arith.constant 0 : index
    %c0_16 = arith.constant 0 : index
    %26 = vector.load %arg7[%c0_15, %c0_16] : memref<1x128xf32, #tpu.memory_space<vmem>>, vector<1x128xf32>
    %27 = vector.broadcast %26 : vector<1x128xf32> to vector<256x128xf32>
    %28 = arith.addf %25, %27 : vector<256x128xf32>
    %c0_17 = arith.constant 0 : index
    %c0_18 = arith.constant 0 : index
    %29 = vector.load %arg8[%c0_17, %c0_18] : memref<1x128xf32, #tpu.memory_space<vmem>>, vector<1x128xf32>
    %30 = vector.broadcast %4 : vector<256x1xf32> to vector<256x128xf32>
    %31 = vector.broadcast %29 : vector<1x128xf32> to vector<256x128xf32>
    %32 = arith.mulf %30, %31 : vector<256x128xf32>
    %33 = arith.subf %28, %32 : vector<256x128xf32>
    %c0_19 = arith.constant 0 : index
    %c0_20 = arith.constant 0 : index
    %34 = vector.load %arg9[%c0_19, %c0_20] : memref<256x128xf32, #tpu.memory_space<vmem>>, vector<256x128xf32>
    tpu.vector_store %arg9[%c0_19, %c0_20], %33 {strides = array<i32>} : memref<256x128xf32, #tpu.memory_space<vmem>>, vector<256x128xf32>,
    return
  }
  func.func @transform_0(%arg0: i32) -> (i32, i32) {
    %c0_i32 = arith.constant 0 : i32
    %c0_i32_0 = arith.constant 0 : i32
    return %arg0, %c0_i32 : i32, i32
  }
  func.func @transform_1(%arg0: i32) -> (i32, i32) {
    %c0_i32 = arith.constant 0 : i32
    %c0_i32_0 = arith.constant 0 : i32
    return %arg0, %c0_i32 : i32, i32
  }
  func.func @transform_2(%arg0: i32) -> (i32, i32) {
    %c0_i32 = arith.constant 0 : i32
    %c0_i32_0 = arith.constant 0 : i32
    %c0_i32_1 = arith.constant 0 : i32
    return %c0_i32, %c0_i32_0 : i32, i32
  }
  func.func @transform_3(%arg0: i32) -> (i32, i32) {
    %c0_i32 = arith.constant 0 : i32
    %c0_i32_0 = arith.constant 0 : i32
    %c0_i32_1 = arith.constant 0 : i32
    return %c0_i32, %c0_i32_0 : i32, i32
  }
  func.func @transform_4(%arg0: i32) -> (i32, i32) {
    %c0_i32 = arith.constant 0 : i32
    %c0_i32_0 = arith.constant 0 : i32
    %c0_i32_1 = arith.constant 0 : i32
    return %c0_i32, %c0_i32_0 : i32, i32
  }
  func.func @transform_5(%arg0: i32) -> (i32, i32) {
    %c0_i32 = arith.constant 0 : i32
    %c0_i32_0 = arith.constant 0 : i32
    %c0_i32_1 = arith.constant 0 : i32
    return %c0_i32, %c0_i32_0 : i32, i32
  }
  func.func @transform_6(%arg0: i32) -> (i32, i32) {
    %c0_i32 = arith.constant 0 : i32
    %c0_i32_0 = arith.constant 0 : i32
    %c0_i32_1 = arith.constant 0 : i32
    return %c0_i32, %c0_i32_0 : i32, i32
  }
  func.func @transform_7(%arg0: i32) -> (i32, i32) {
    %c0_i32 = arith.constant 0 : i32
    %c0_i32_0 = arith.constant 0 : i32
    %c0_i32_1 = arith.constant 0 : i32
    return %c0_i32, %c0_i32_0 : i32, i32
  }
  func.func @transform_8(%arg0: i32) -> (i32, i32) {
    %c0_i32 = arith.constant 0 : i32
    %c0_i32_0 = arith.constant 0 : i32
    return %arg0, %c0_i32 : i32, i32
  }
}

</mosaic_0001>

<llo_original>
// kernel: tpu_custom_call.1
$region0: #{tpu_custom_call.1}
  #allocation0 [shape = 'u32[]', space=smem, size = 0x4, offset = 0x4, fixed_abs, tag = 'smem constant byte address 0x4 - core index']
  #allocation1 [shape = 'u32[144,128]{1,0:T(1,128)}', space=vmem, size = 0x12000, scoped, tag = 'internal scratch']
  %s0 = inlined_call_operand.vmem [shape: f32[512,128], index: 0, kind: input, shape index: {}]
  %s1 = inlined_call_operand.vmem [shape: f32[512,1], index: 1, kind: input, shape index: {}]
  %s2 = inlined_call_operand.hbm [shape: f32[128,256], index: 2, kind: input, shape index: {}]
  %s3 = inlined_call_operand.vmem [shape: f32[1,256], index: 3, kind: input, shape index: {}]
  %s4 = inlined_call_operand.vmem [shape: f32[1,256], index: 4, kind: input, shape index: {}]
  %s5 = inlined_call_operand.hbm [shape: f32[256,128], index: 5, kind: input, shape index: {}]
  %s6 = inlined_call_operand.vmem [shape: f32[1,128], index: 6, kind: input, shape index: {}]
  %s7 = inlined_call_operand.vmem [shape: f32[1,128], index: 7, kind: input, shape index: {}]
  %s8 = inlined_call_operand.hbm [shape: f32[512,128], index: 8, kind: output, shape index: {}]
  %s9 = sld [smem:[#allocation0]]
  $region73: #{tpu_custom_call.1} parent=0
    _
  %s11 = ssub.s32 1, %s9
  %s12 = scalar_select 0, %s11, %s9
  $region1: #{tpu_custom_call.1} parent=0
    #allocation2 [shape = 'u8[131072]{0}', space=vmem, size = 0x20000, scoped, tag = 'input window, operand 2, single buffered']
    #allocation3 [shape = 's32[2]{0}', space=sflag, size = 0x8, scoped, tag = 'scoped memory for tpu_custom_call.1']
    #allocation4 [shape = 's32[2]{0}', space=sflag, size = 0x8, scoped, tag = 'scoped memory for tpu_custom_call.1']
    #allocation5 [shape = 'u8[131072]{0}', space=vmem, size = 0x20000, scoped, tag = 'input window, operand 5, single buffered']
    #allocation6 [shape = 's32[1]{0}', space=sflag, size = 0x4, scoped, tag = 'scoped memory for tpu_custom_call.1']
    #allocation7 [shape = 'u8[262144]{0}', space=vmem, size = 0x40000, scoped, tag = 'output window, operand 0']
    %13 = vsyncpa [#allocation3], 0
    %14 = vsyncpa [#allocation6], 0
    %15 = vsyncpa [#allocation4], 0
    %s16 = scalar_lea.sflag [#allocation4], 1
    %17 = vsyncpa %s16, 0
    loop: start=0, step=1, limit=4
    $region2: #{tpu_custom_call.1} parent=1 // loop_pre_header
      _
    $region3: #{tpu_custom_call.1} parent=1 // loop_header
      %s19 = sphi 0, %s23
      %p20 = scmp.ge.s32.totalorder %s19, 4
      %s29 = sphi 0, %s31
      %s32 = sphi 0, %s29
      %s33 = sphi 0, %s32
      %s49 = sphi 0, %s33
      %s55 = sphi 0, %s57
      %s58 = sphi 0, %s55
      %s59 = sphi 0, %s58
      %s75 = sphi 0, %s59
      %s79 = sphi 0, %s79
      %s81 = sphi 0, %s79
      %s82 = sphi 0, %s81
      %s96 = sphi 0, %s82
      %s100 = sphi 0, %s100
      %s102 = sphi 0, %s100
      %s103 = sphi 0, %s102
      %s117 = sphi 0, %s103
      %s121 = sphi 0, %s121
      %s123 = sphi 0, %s121
      %s124 = sphi 0, %s123
      %s138 = sphi 0, %s124
      %s142 = sphi 0, %s142
      %s144 = sphi 0, %s142
      %s145 = sphi 0, %s144
      %s159 = sphi 0, %s145
      %s163 = sphi 0, %s163
      %s165 = sphi 0, %s163
      %s166 = sphi 0, %s165
      %s180 = sphi 0, %s166
      %s184 = sphi 0, %s184
      %s186 = sphi 0, %s184
      %s187 = sphi 0, %s186
      %s201 = sphi 0, %s187
      %s207 = sphi 0, %s209
      %s210 = sphi 0, %s207
      %s211 = sphi 0, %s210
      %s227 = sphi 0, %s211
    $region4: #{tpu_custom_call.1} parent=1 // loop_header_branch
      %22 = sbr.rel (%p20) target = $region8
    $region5: #{tpu_custom_call.1} parent=1 // loop_body
      %s24 = ssub.s32 %s19, 1
      %s25 = ssub.s32 %s19, 2
      %s26 = sadd.s32 %s19, 1
      %s27 = ssub.s32 %s19, %s26
      %p28 = scmp.eq.s32.totalorder %s27, 0
      %s30 = sadd.s32 %s29, 1
      %s31 = scalar_select %p28, %s29, %s30
      %p34 = pneg %p28
      %p35 = scmp.eq.s32.totalorder %s19, 1
      %p36 = por %p34, %p35
      %p37 = scmp.ne.s32.totalorder %s29, %s32
      %p38 = scmp.eq.s32.totalorder %s19, 0
      %p39 = por %p37, %p38
      %p40 = scmp.ne.s32.totalorder %s29, %s32
      %p41 = scmp.eq.s32.totalorder %s24, 1
      %p42 = por %p40, %p41
      %p43 = scmp.ne.s32.totalorder %s32, %s33
      %p44 = scmp.eq.s32.totalorder %s24, 0
      %p45 = por %p43, %p44
      %p46 = scmp.ne.s32.totalorder %s32, %s33
      %p47 = scmp.eq.s32.totalorder %s25, 1
      %p48 = por %p46, %p47
      %p50 = scmp.ne.s32.totalorder %s33, %s49
      %p51 = scmp.eq.s32.totalorder %s25, 0
      %p52 = por %p50, %p51
      %s53 = ssub.s32 %s19, %s26
      %p54 = scmp.eq.s32.totalorder %s53, 0
      %s56 = sadd.s32 %s55, 1
      %s57 = scalar_select %p54, %s55, %s56
      %p60 = pneg %p54
      %p61 = scmp.eq.s32.totalorder %s19, 1
      %p62 = por %p60, %p61
      %p63 = scmp.ne.s32.totalorder %s55, %s58
      %p64 = scmp.eq.s32.totalorder %s19, 0
      %p65 = por %p63, %p64
      %p66 = scmp.ne.s32.totalorder %s55, %s58
      %p67 = scmp.eq.s32.totalorder %s24, 1
      %p68 = por %p66, %p67
      %p69 = scmp.ne.s32.totalorder %s58, %s59
      %p70 = scmp.eq.s32.totalorder %s24, 0
      %p71 = por %p69, %p70
      %p72 = scmp.ne.s32.totalorder %s58, %s59
      %p73 = scmp.eq.s32.totalorder %s25, 1
      %p74 = por %p72, %p73
      %p76 = scmp.ne.s32.totalorder %s59, %s75
      %p77 = scmp.eq.s32.totalorder %s25, 0
      %p78 = por %p76, %p77
      %s80 = sadd.s32 %s79, 1
      %p83 = scmp.eq.s32.totalorder %s19, 1
      %p84 = scmp.ne.s32.totalorder %s79, %s81
      %p85 = scmp.eq.s32.totalorder %s19, 0
      %p86 = por %p84, %p85
      %p87 = scmp.ne.s32.totalorder %s79, %s81
      %p88 = scmp.eq.s32.totalorder %s24, 1
      %p89 = por %p87, %p88
      %p90 = scmp.ne.s32.totalorder %s81, %s82
      %p91 = scmp.eq.s32.totalorder %s24, 0
      %p92 = por %p90, %p91
      %p93 = scmp.ne.s32.totalorder %s81, %s82
      %p94 = scmp.eq.s32.totalorder %s25, 1
      %p95 = por %p93, %p94
      %p97 = scmp.ne.s32.totalorder %s82, %s96
      %p98 = scmp.eq.s32.totalorder %s25, 0
      %p99 = por %p97, %p98
      %s101 = sadd.s32 %s100, 1
      %p104 = scmp.eq.s32.totalorder %s19, 1
      %p105 = scmp.ne.s32.totalorder %s100, %s102
      %p106 = scmp.eq.s32.totalorder %s19, 0
      %p107 = por %p105, %p106
      %p108 = scmp.ne.s32.totalorder %s100, %s102
      %p109 = scmp.eq.s32.totalorder %s24, 1
      %p110 = por %p108, %p109
      %p111 = scmp.ne.s32.totalorder %s102, %s103
      %p112 = scmp.eq.s32.totalorder %s24, 0
      %p113 = por %p111, %p112
      %p114 = scmp.ne.s32.totalorder %s102, %s103
      %p115 = scmp.eq.s32.totalorder %s25, 1
      %p116 = por %p114, %p115
      %p118 = scmp.ne.s32.totalorder %s103, %s117
      %p119 = scmp.eq.s32.totalorder %s25, 0
      %p120 = por %p118, %p119
      %s122 = sadd.s32 %s121, 1
      %p125 = scmp.eq.s32.totalorder %s19, 1
      %p126 = scmp.ne.s32.totalorder %s121, %s123
      %p127 = scmp.eq.s32.totalorder %s19, 0
      %p128 = por %p126, %p127
      %p129 = scmp.ne.s32.totalorder %s121, %s123
      %p130 = scmp.eq.s32.totalorder %s24, 1
      %p131 = por %p129, %p130
      %p132 = scmp.ne.s32.totalorder %s123, %s124
      %p133 = scmp.eq.s32.totalorder %s24, 0
      %p134 = por %p132, %p133
      %p135 = scmp.ne.s32.totalorder %s123, %s124
      %p136 = scmp.eq.s32.totalorder %s25, 1
      %p137 = por %p135, %p136
      %p139 = scmp.ne.s32.totalorder %s124, %s138
      %p140 = scmp.eq.s32.totalorder %s25, 0
      %p141 = por %p139, %p140
      %s143 = sadd.s32 %s142, 1
      %p146 = scmp.eq.s32.totalorder %s19, 1
      %p147 = scmp.ne.s32.totalorder %s142, %s144
      %p148 = scmp.eq.s32.totalorder %s19, 0
      %p149 = por %p147, %p148
      %p150 = scmp.ne.s32.totalorder %s142, %s144
      %p151 = scmp.eq.s32.totalorder %s24, 1
      %p152 = por %p150, %p151
      %p153 = scmp.ne.s32.totalorder %s144, %s145
      %p154 = scmp.eq.s32.totalorder %s24, 0
      %p155 = por %p153, %p154
      %p156 = scmp.ne.s32.totalorder %s144, %s145
      %p157 = scmp.eq.s32.totalorder %s25, 1
      %p158 = por %p156, %p157
      %p160 = scmp.ne.s32.totalorder %s145, %s159
      %p161 = scmp.eq.s32.totalorder %s25, 0
      %p162 = por %p160, %p161
      %s164 = sadd.s32 %s163, 1
      %p167 = scmp.eq.s32.totalorder %s19, 1
      %p168 = scmp.ne.s32.totalorder %s163, %s165
      %p169 = scmp.eq.s32.totalorder %s19, 0
      %p170 = por %p168, %p169
      %p171 = scmp.ne.s32.totalorder %s163, %s165
      %p172 = scmp.eq.s32.totalorder %s24, 1
      %p173 = por %p171, %p172
      %p174 = scmp.ne.s32.totalorder %s165, %s166
      %p175 = scmp.eq.s32.totalorder %s24, 0
      %p176 = por %p174, %p175
      %p177 = scmp.ne.s32.totalorder %s165, %s166
      %p178 = scmp.eq.s32.totalorder %s25, 1
      %p179 = por %p177, %p178
      %p181 = scmp.ne.s32.totalorder %s166, %s180
      %p182 = scmp.eq.s32.totalorder %s25, 0
      %p183 = por %p181, %p182
      %s185 = sadd.s32 %s184, 1
      %p188 = scmp.eq.s32.totalorder %s19, 1
      %p189 = scmp.ne.s32.totalorder %s184, %s186
      %p190 = scmp.eq.s32.totalorder %s19, 0
      %p191 = por %p189, %p190
      %p192 = scmp.ne.s32.totalorder %s184, %s186
      %p193 = scmp.eq.s32.totalorder %s24, 1
      %p194 = por %p192, %p193
      %p195 = scmp.ne.s32.totalorder %s186, %s187
      %p196 = scmp.eq.s32.totalorder %s24, 0
      %p197 = por %p195, %p196
      %p198 = scmp.ne.s32.totalorder %s186, %s187
      %p199 = scmp.eq.s32.totalorder %s25, 1
      %p200 = por %p198, %p199
      %p202 = scmp.ne.s32.totalorder %s187, %s201
      %p203 = scmp.eq.s32.totalorder %s25, 0
      %p204 = por %p202, %p203
      %s205 = ssub.s32 %s19, %s26
      %p206 = scmp.eq.s32.totalorder %s205, 0
      %s208 = sadd.s32 %s207, 1
      %s209 = scalar_select %p206, %s207, %s208
      %p212 = pneg %p206
      %p213 = scmp.eq.s32.totalorder %s19, 1
      %p214 = por %p212, %p213
      %p215 = scmp.ne.s32.totalorder %s207, %s210
      %p216 = scmp.eq.s32.totalorder %s19, 0
      %p217 = por %p215, %p216
      %p218 = scmp.ne.s32.totalorder %s207, %s210
      %p219 = scmp.eq.s32.totalorder %s24, 1
      %p220 = por %p218, %p219
      %p221 = scmp.ne.s32.totalorder %s210, %s211
      %p222 = scmp.eq.s32.totalorder %s24, 0
      %p223 = por %p221, %p222
      %p224 = scmp.ne.s32.totalorder %s210, %s211
      %p225 = scmp.eq.s32.totalorder %s25, 1
      %p226 = por %p224, %p225
      %p228 = scmp.ne.s32.totalorder %s211, %s227
      %p229 = scmp.eq.s32.totalorder %s25, 0
      %p230 = por %p228, %p229
      %p231 = scmp.le.s32.totalorder 1, %s19
      %p232 = scmp.lt.s32.totalorder %s19, 3
      %p233 = pnand %p231, %p232
      %p234 = pneg %p233
      // Predicated region
      $region9: #{tpu_custom_call.1} parent=5 // pred_check
        _
      $region10: #{tpu_custom_call.1} parent=5 // pred_check_branch
        %236 = sbr.rel (%p233) target = $region12
      $region11: #{tpu_custom_call.1} parent=5 // pred_region
        %s237 = ssub.s32 %s19, 1
        // Predicated region
        $region13: #{tpu_custom_call.1} parent=11 // pred_check
          %p238 = pneg %p92
        $region14: #{tpu_custom_call.1} parent=11 // pred_check_branch
          %240 = sbr.rel (%p238) target = $region16
        $region15: #{tpu_custom_call.1} parent=11 // pred_region
          %s242 = ssub.s32 4096, 4096
          %243 = vsyncadd [#allocation3], %s242
          %s244 = sshll.u32 [#allocation2], 4
          %s245 = int_to_ptr.vmem [resolvable:$true] %s244
          %250 = dma.hbm_to_vmem [thread:$0]  %s2, 4096, %s245, [#allocation3], 256, 256, 16
        $region16: #{tpu_custom_call.1} parent=11 // pred_fallthru
          _
        // Predicated region
        $region17: #{tpu_custom_call.1} parent=11 // pred_check
          %p251 = pneg %p113
        $region18: #{tpu_custom_call.1} parent=11 // pred_check_branch
          %253 = sbr.rel (%p251) target = $region20
        $region19: #{tpu_custom_call.1} parent=11 // pred_region
          _
        $region20: #{tpu_custom_call.1} parent=11 // pred_fallthru
          _
        // Predicated region
        $region21: #{tpu_custom_call.1} parent=11 // pred_check
          %p254 = pneg %p134
        $region22: #{tpu_custom_call.1} parent=11 // pred_check_branch
          %256 = sbr.rel (%p254) target = $region24
        $region23: #{tpu_custom_call.1} parent=11 // pred_region
          _
        $region24: #{tpu_custom_call.1} parent=11 // pred_fallthru
          _
        // Predicated region
        $region25: #{tpu_custom_call.1} parent=11 // pred_check
          %p257 = pneg %p155
        $region26: #{tpu_custom_call.1} parent=11 // pred_check_branch
          %259 = sbr.rel (%p257) target = $region28
        $region27: #{tpu_custom_call.1} parent=11 // pred_region
          %s261 = ssub.s32 4096, 4096
          %262 = vsyncadd [#allocation6], %s261
          %s263 = sshll.u32 [#allocation5], 4
          %s264 = int_to_ptr.vmem [resolvable:$true] %s263
          %269 = dma.hbm_to_vmem [thread:$0]  %s5, 4096, %s264, [#allocation6], 128, 128, 8
        $region28: #{tpu_custom_call.1} parent=11 // pred_fallthru
          _
        // Predicated region
        $region29: #{tpu_custom_call.1} parent=11 // pred_check
          %p270 = pneg %p176
        $region30: #{tpu_custom_call.1} parent=11 // pred_check_branch
          %272 = sbr.rel (%p270) target = $region32
        $region31: #{tpu_custom_call.1} parent=11 // pred_region
          _
        $region32: #{tpu_custom_call.1} parent=11 // pred_fallthru
          _
        // Predicated region
        $region33: #{tpu_custom_call.1} parent=11 // pred_check
          %p273 = pneg %p197
        $region34: #{tpu_custom_call.1} parent=11 // pred_check_branch
          %275 = sbr.rel (%p273) target = $region36
        $region35: #{tpu_custom_call.1} parent=11 // pred_region
          _
        $region36: #{tpu_custom_call.1} parent=11 // pred_fallthru
          _
      $region12: #{tpu_custom_call.1} parent=5 // pred_fallthru
        _
      %p276 = scmp.lt.s32.totalorder %s19, 2
      // Predicated region
      $region37: #{tpu_custom_call.1} parent=5 // pred_check
        %p277 = pneg %p276
      $region38: #{tpu_custom_call.1} parent=5 // pred_check_branch
        %279 = sbr.rel (%p277) target = $region40
      $region39: #{tpu_custom_call.1} parent=5 // pred_region
        // Predicated region
        $region41: #{tpu_custom_call.1} parent=39 // pred_check
          %p280 = pneg %p39
        $region42: #{tpu_custom_call.1} parent=39 // pred_check_branch
          %282 = sbr.rel (%p280) target = $region44
        $region43: #{tpu_custom_call.1} parent=39 // pred_region
          %s283 = smul.u32 32, %s19
          %p284 = scmp.lt.s32.totalorder %s283, 63
          %s285 = scalar_select %p284, %s283, 63
          %s286 = smul.addr %s285, 8
          %s287 = scalar_lea.vmem %s0, %s286
          %s288 = smul.u32 32, %s19
        $region44: #{tpu_custom_call.1} parent=39 // pred_fallthru
          _
        // Predicated region
        $region45: #{tpu_custom_call.1} parent=39 // pred_check
          %p289 = pneg %p65
        $region46: #{tpu_custom_call.1} parent=39 // pred_check_branch
          %291 = sbr.rel (%p289) target = $region48
        $region47: #{tpu_custom_call.1} parent=39 // pred_region
          %s292 = smul.u32 32, %s19
          %p293 = scmp.lt.s32.totalorder %s292, 63
          %s294 = scalar_select %p293, %s292, 63
          %s295 = smul.addr %s294, 8
          %s296 = scalar_lea.vmem %s1, %s295
          %s297 = smul.u32 32, %s19
        $region48: #{tpu_custom_call.1} parent=39 // pred_fallthru
          _
      $region40: #{tpu_custom_call.1} parent=5 // pred_fallthru
        _
      %p298 = scmp.le.s32.totalorder 1, %s19
      %p299 = scmp.lt.s32.totalorder %s19, 3
      %p300 = pnand %p298, %p299
      %p301 = pneg %p300
      // Predicated region
      $region49: #{tpu_custom_call.1} parent=5 // pred_check
        _
      $region50: #{tpu_custom_call.1} parent=5 // pred_check_branch
        %303 = sbr.rel (%p300) target = $region52
      $region51: #{tpu_custom_call.1} parent=5 // pred_region
        %s304 = ssub.s32 %s19, 1
        // Predicated region
        $region53: #{tpu_custom_call.1} parent=51 // pred_check
          %p305 = pneg %p92
        $region54: #{tpu_custom_call.1} parent=51 // pred_check_branch
          %307 = sbr.rel (%p305) target = $region56
        $region55: #{tpu_custom_call.1} parent=51 // pred_region
          %308 = dma.done [#allocation3], 4096
        $region56: #{tpu_custom_call.1} parent=51 // pred_fallthru
          _
        // Predicated region
        $region57: #{tpu_custom_call.1} parent=51 // pred_check
          %p309 = pneg %p155
        $region58: #{tpu_custom_call.1} parent=51 // pred_check_branch
          %311 = sbr.rel (%p309) target = $region60
        $region59: #{tpu_custom_call.1} parent=51 // pred_region
          %312 = dma.done [#allocation6], 4096
        $region60: #{tpu_custom_call.1} parent=51 // pred_fallthru
          _
        %s313 = smul.u32 32, %s24
        %p314 = scmp.lt.s32.totalorder %s313, 63
        %s315 = scalar_select %p314, %s313, 63
        %s316 = smul.addr %s315, 8
        %s317 = scalar_lea.vmem %s0, %s316
        %p318 = pneg %p45
        %p319 = pneg %p42
        %s320 = smul.u32 32, %s24
        %p321 = scmp.lt.s32.totalorder %s320, 63
        %s322 = scalar_select %p321, %s320, 63
        %s323 = smul.addr %s322, 8
        %s324 = scalar_lea.vmem %s1, %s323
        %p325 = pneg %p71
        %p326 = pneg %p68
        %p327 = pneg %p92
        %p328 = pneg %p89
        %p329 = pneg %p113
        %p330 = pneg %p110
        %p331 = pneg %p134
        %p332 = pneg %p131
        %p333 = pneg %p155
        %p334 = pneg %p152
        %p335 = pneg %p176
        %p336 = pneg %p173
        %p337 = pneg %p197
        %p338 = pneg %p194
        %p339 = pneg %p223
        %p340 = pneg %p220
        %s341 = sand.u32 %s210, 1
        %s342 = scalar_lea.sflag [#allocation4], %s341
        %s343 = sand.u32 %s210, 1
        %s344 = smul.addr %s343, 256
        %s345 = scalar_lea.vmem [#allocation7], %s344
        %s346 = smul.u32 32, %s24
        %p347 = scmp.lt.s32.totalorder %s346, 63
        %s348 = scalar_select %p347, %s346, 63
        %s349 = smul.addr %s348, 8
        %s350 = scalar_lea.vmem %s0, %s349
        %s351 = smul.u32 32, %s24
        %s352 = smul.u32 32, %s24
        %p353 = scmp.lt.s32.totalorder %s352, 63
        %s354 = scalar_select %p353, %s352, 63
        %s355 = smul.addr %s354, 8
        %s356 = scalar_lea.vmem %s1, %s355
        %s357 = smul.u32 32, %s24
        %s358 = smul.u32 32, %s24
        %v359 = vld [vmem:[%s350] sm:$0xff]
        %v360 = vld [vmem:[%s350 + $0x8] sm:$0xff]
        %v361 = vld [vmem:[%s350 + $0x10] sm:$0xff]
        %v362 = vld [vmem:[%s350 + $0x18] sm:$0xff]
        %v363 = vld [vmem:[%s350 + $0x20] sm:$0xff]
        %v364 = vld [vmem:[%s350 + $0x28] sm:$0xff]
        %v365 = vld [vmem:[%s350 + $0x30] sm:$0xff]
        %v366 = vld [vmem:[%s350 + $0x38] sm:$0xff]
        %v367 = vld [vmem:[%s350 + $0x40] sm:$0xff]
        %v368 = vld [vmem:[%s350 + $0x48] sm:$0xff]
        %v369 = vld [vmem:[%s350 + $0x50] sm:$0xff]
        %v370 = vld [vmem:[%s350 + $0x58] sm:$0xff]
        %v371 = vld [vmem:[%s350 + $0x60] sm:$0xff]
        %v372 = vld [vmem:[%s350 + $0x68] sm:$0xff]
        %v373 = vld [vmem:[%s350 + $0x70] sm:$0xff]
        %v374 = vld [vmem:[%s350 + $0x78] sm:$0xff]
        %v375 = vld [vmem:[%s350 + $0x80] sm:$0xff]
        %v376 = vld [vmem:[%s350 + $0x88] sm:$0xff]
        %v377 = vld [vmem:[%s350 + $0x90] sm:$0xff]
        %v378 = vld [vmem:[%s350 + $0x98] sm:$0xff]
        %v379 = vld [vmem:[%s350 + $0xa0] sm:$0xff]
        %v380 = vld [vmem:[%s350 + $0xa8] sm:$0xff]
        %v381 = vld [vmem:[%s350 + $0xb0] sm:$0xff]
        %v382 = vld [vmem:[%s350 + $0xb8] sm:$0xff]
        %v383 = vld [vmem:[%s350 + $0xc0] sm:$0xff]
        %v384 = vld [vmem:[%s350 + $0xc8] sm:$0xff]
        %v385 = vld [vmem:[%s350 + $0xd0] sm:$0xff]
        %v386 = vld [vmem:[%s350 + $0xd8] sm:$0xff]
        %v387 = vld [vmem:[%s350 + $0xe0] sm:$0xff]
        %v388 = vld [vmem:[%s350 + $0xe8] sm:$0xff]
        %v389 = vld [vmem:[%s350 + $0xf0] sm:$0xff]
        %v390 = vld [vmem:[%s350 + $0xf8] sm:$0xff]
        %v391 = vld [vmem:[%s356] sm:$0xff]
        %v392 = vld [vmem:[%s356 + $0x8] sm:$0xff]
        %v393 = vld [vmem:[%s356 + $0x10] sm:$0xff]
        %v394 = vld [vmem:[%s356 + $0x18] sm:$0xff]
        %v395 = vld [vmem:[%s356 + $0x20] sm:$0xff]
        %v396 = vld [vmem:[%s356 + $0x28] sm:$0xff]
        %v397 = vld [vmem:[%s356 + $0x30] sm:$0xff]
        %v398 = vld [vmem:[%s356 + $0x38] sm:$0xff]
        %v399 = vld [vmem:[%s356 + $0x40] sm:$0xff]
        %v400 = vld [vmem:[%s356 + $0x48] sm:$0xff]
        %v401 = vld [vmem:[%s356 + $0x50] sm:$0xff]
        %v402 = vld [vmem:[%s356 + $0x58] sm:$0xff]
        %v403 = vld [vmem:[%s356 + $0x60] sm:$0xff]
        %v404 = vld [vmem:[%s356 + $0x68] sm:$0xff]
        %v405 = vld [vmem:[%s356 + $0x70] sm:$0xff]
        %v406 = vld [vmem:[%s356 + $0x78] sm:$0xff]
        %v407 = vld [vmem:[%s356 + $0x80] sm:$0xff]
        %v408 = vld [vmem:[%s356 + $0x88] sm:$0xff]
        %v409 = vld [vmem:[%s356 + $0x90] sm:$0xff]
        %v410 = vld [vmem:[%s356 + $0x98] sm:$0xff]
        %v411 = vld [vmem:[%s356 + $0xa0] sm:$0xff]
        %v412 = vld [vmem:[%s356 + $0xa8] sm:$0xff]
        %v413 = vld [vmem:[%s356 + $0xb0] sm:$0xff]
        %v414 = vld [vmem:[%s356 + $0xb8] sm:$0xff]
        %v415 = vld [vmem:[%s356 + $0xc0] sm:$0xff]
        %v416 = vld [vmem:[%s356 + $0xc8] sm:$0xff]
        %v417 = vld [vmem:[%s356 + $0xd0] sm:$0xff]
        %v418 = vld [vmem:[%s356 + $0xd8] sm:$0xff]
        %v419 = vld [vmem:[%s356 + $0xe0] sm:$0xff]
        %v420 = vld [vmem:[%s356 + $0xe8] sm:$0xff]
        %v421 = vld [vmem:[%s356 + $0xf0] sm:$0xff]
        %v422 = vld [vmem:[%s356 + $0xf8] sm:$0xff]
        %v423 = vsub.f32 1.0, %v391
        %v424 = vsub.f32 1.0, %v392
        %v425 = vsub.f32 1.0, %v393
        %v426 = vsub.f32 1.0, %v394
        %v427 = vsub.f32 1.0, %v395
        %v428 = vsub.f32 1.0, %v396
        %v429 = vsub.f32 1.0, %v397
        %v430 = vsub.f32 1.0, %v398
        %v431 = vsub.f32 1.0, %v399
        %v432 = vsub.f32 1.0, %v400
        %v433 = vsub.f32 1.0, %v401
        %v434 = vsub.f32 1.0, %v402
        %v435 = vsub.f32 1.0, %v403
        %v436 = vsub.f32 1.0, %v404
        %v437 = vsub.f32 1.0, %v405
        %v438 = vsub.f32 1.0, %v406
        %v439 = vsub.f32 1.0, %v407
        %v440 = vsub.f32 1.0, %v408
        %v441 = vsub.f32 1.0, %v409
        %v442 = vsub.f32 1.0, %v410
        %v443 = vsub.f32 1.0, %v411
        %v444 = vsub.f32 1.0, %v412
        %v445 = vsub.f32 1.0, %v413
        %v446 = vsub.f32 1.0, %v414
        %v447 = vsub.f32 1.0, %v415
        %v448 = vsub.f32 1.0, %v416
        %v449 = vsub.f32 1.0, %v417
        %v450 = vsub.f32 1.0, %v418
        %v451 = vsub.f32 1.0, %v419
        %v452 = vsub.f32 1.0, %v420
        %v453 = vsub.f32 1.0, %v421
        %v454 = vsub.f32 1.0, %v422
        %v455 = vmul.f32 %v391, %v423
        %v456 = vmul.f32 %v392, %v424
        %v457 = vmul.f32 %v393, %v425
        %v458 = vmul.f32 %v394, %v426
        %v459 = vmul.f32 %v395, %v427
        %v460 = vmul.f32 %v396, %v428
        %v461 = vmul.f32 %v397, %v429
        %v462 = vmul.f32 %v398, %v430
        %v463 = vmul.f32 %v399, %v431
        %v464 = vmul.f32 %v400, %v432
        %v465 = vmul.f32 %v401, %v433
        %v466 = vmul.f32 %v402, %v434
        %v467 = vmul.f32 %v403, %v435
        %v468 = vmul.f32 %v404, %v436
        %v469 = vmul.f32 %v405, %v437
        %v470 = vmul.f32 %v406, %v438
        %v471 = vmul.f32 %v407, %v439
        %v472 = vmul.f32 %v408, %v440
        %v473 = vmul.f32 %v409, %v441
        %v474 = vmul.f32 %v410, %v442
        %v475 = vmul.f32 %v411, %v443
        %v476 = vmul.f32 %v412, %v444
        %v477 = vmul.f32 %v413, %v445
        %v478 = vmul.f32 %v414, %v446
        %v479 = vmul.f32 %v415, %v447
        %v480 = vmul.f32 %v416, %v448
        %v481 = vmul.f32 %v417, %v449
        %v482 = vmul.f32 %v418, %v450
        %v483 = vmul.f32 %v419, %v451
        %v484 = vmul.f32 %v420, %v452
        %v485 = vmul.f32 %v421, %v453
        %v486 = vmul.f32 %v422, %v454
        %v487 = vld [vmem:[#allocation2] sm:$0xff]
        %v488 = vld [vmem:[#allocation2 + $0x8] sm:$0xff]
        %v489 = vld [vmem:[#allocation2 + $0x10] sm:$0xff]
        %v490 = vld [vmem:[#allocation2 + $0x18] sm:$0xff]
        %v491 = vld [vmem:[#allocation2 + $0x20] sm:$0xff]
        %v492 = vld [vmem:[#allocation2 + $0x28] sm:$0xff]
        %v493 = vld [vmem:[#allocation2 + $0x30] sm:$0xff]
        %v494 = vld [vmem:[#allocation2 + $0x38] sm:$0xff]
        %v495 = vld [vmem:[#allocation2 + $0x40] sm:$0xff]
        %v496 = vld [vmem:[#allocation2 + $0x48] sm:$0xff]
        %v497 = vld [vmem:[#allocation2 + $0x50] sm:$0xff]
        %v498 = vld [vmem:[#allocation2 + $0x58] sm:$0xff]
        %v499 = vld [vmem:[#allocation2 + $0x60] sm:$0xff]
        %v500 = vld [vmem:[#allocation2 + $0x68] sm:$0xff]
        %v501 = vld [vmem:[#allocation2 + $0x70] sm:$0xff]
        %v502 = vld [vmem:[#allocation2 + $0x78] sm:$0xff]
        %v503 = vld [vmem:[#allocation2 + $0x80] sm:$0xff]
        %v504 = vld [vmem:[#allocation2 + $0x88] sm:$0xff]
        %v505 = vld [vmem:[#allocation2 + $0x90] sm:$0xff]
        %v506 = vld [vmem:[#allocation2 + $0x98] sm:$0xff]
        %v507 = vld [vmem:[#allocation2 + $0xa0] sm:$0xff]
        %v508 = vld [vmem:[#allocation2 + $0xa8] sm:$0xff]
        %v509 = vld [vmem:[#allocation2 + $0xb0] sm:$0xff]
        %v510 = vld [vmem:[#allocation2 + $0xb8] sm:$0xff]
        %v511 = vld [vmem:[#allocation2 + $0xc0] sm:$0xff]
        %v512 = vld [vmem:[#allocation2 + $0xc8] sm:$0xff]
        %v513 = vld [vmem:[#allocation2 + $0xd0] sm:$0xff]
        %v514 = vld [vmem:[#allocation2 + $0xd8] sm:$0xff]
        %v515 = vld [vmem:[#allocation2 + $0xe0] sm:$0xff]
        %v516 = vld [vmem:[#allocation2 + $0xe8] sm:$0xff]
        %v517 = vld [vmem:[#allocation2 + $0xf0] sm:$0xff]
        %v518 = vld [vmem:[#allocation2 + $0xf8] sm:$0xff]
        %v519 = vld [vmem:[%s3] sm:$0x3]
        %521 = vset.pattern.permute.xlu0 0
        %522 = vperm.xlu0 %521, %v391
        %v523 = vpop.permute.xlu0 %522
        %526 = vset.pattern.permute.xlu0 0
        %527 = vperm.xlu0 %526, %v392
        %v528 = vpop.permute.xlu0 %527
        %531 = vset.pattern.permute.xlu0 0
        %532 = vperm.xlu0 %531, %v393
        %v533 = vpop.permute.xlu0 %532
        %536 = vset.pattern.permute.xlu0 0
        %537 = vperm.xlu0 %536, %v394
        %v538 = vpop.permute.xlu0 %537
        %541 = vset.pattern.permute.xlu0 0
        %542 = vperm.xlu0 %541, %v395
        %v543 = vpop.permute.xlu0 %542
        %546 = vset.pattern.permute.xlu0 0
        %547 = vperm.xlu0 %546, %v396
        %v548 = vpop.permute.xlu0 %547
        %551 = vset.pattern.permute.xlu0 0
        %552 = vperm.xlu0 %551, %v397
        %v553 = vpop.permute.xlu0 %552
        %556 = vset.pattern.permute.xlu0 0
        %557 = vperm.xlu0 %556, %v398
        %v558 = vpop.permute.xlu0 %557
        %561 = vset.pattern.permute.xlu0 0
        %562 = vperm.xlu0 %561, %v399
        %v563 = vpop.permute.xlu0 %562
        %566 = vset.pattern.permute.xlu0 0
        %567 = vperm.xlu0 %566, %v400
        %v568 = vpop.permute.xlu0 %567
        %571 = vset.pattern.permute.xlu0 0
        %572 = vperm.xlu0 %571, %v401
        %v573 = vpop.permute.xlu0 %572
        %576 = vset.pattern.permute.xlu0 0
        %577 = vperm.xlu0 %576, %v402
        %v578 = vpop.permute.xlu0 %577
        %581 = vset.pattern.permute.xlu0 0
        %582 = vperm.xlu0 %581, %v403
        %v583 = vpop.permute.xlu0 %582
        %586 = vset.pattern.permute.xlu0 0
        %587 = vperm.xlu0 %586, %v404
        %v588 = vpop.permute.xlu0 %587
        %591 = vset.pattern.permute.xlu0 0
        %592 = vperm.xlu0 %591, %v405
        %v593 = vpop.permute.xlu0 %592
        %596 = vset.pattern.permute.xlu0 0
        %597 = vperm.xlu0 %596, %v406
        %v598 = vpop.permute.xlu0 %597
        %601 = vset.pattern.permute.xlu0 0
        %602 = vperm.xlu0 %601, %v407
        %v603 = vpop.permute.xlu0 %602
        %606 = vset.pattern.permute.xlu0 0
        %607 = vperm.xlu0 %606, %v408
        %v608 = vpop.permute.xlu0 %607
        %611 = vset.pattern.permute.xlu0 0
        %612 = vperm.xlu0 %611, %v409
        %v613 = vpop.permute.xlu0 %612
        %616 = vset.pattern.permute.xlu0 0
        %617 = vperm.xlu0 %616, %v410
        %v618 = vpop.permute.xlu0 %617
        %621 = vset.pattern.permute.xlu0 0
        %622 = vperm.xlu0 %621, %v411
        %v623 = vpop.permute.xlu0 %622
        %626 = vset.pattern.permute.xlu0 0
        %627 = vperm.xlu0 %626, %v412
        %v628 = vpop.permute.xlu0 %627
        %631 = vset.pattern.permute.xlu0 0
        %632 = vperm.xlu0 %631, %v413
        %v633 = vpop.permute.xlu0 %632
        %636 = vset.pattern.permute.xlu0 0
        %637 = vperm.xlu0 %636, %v414
        %v638 = vpop.permute.xlu0 %637
        %641 = vset.pattern.permute.xlu0 0
        %642 = vperm.xlu0 %641, %v415
        %v643 = vpop.permute.xlu0 %642
        %646 = vset.pattern.permute.xlu0 0
        %647 = vperm.xlu0 %646, %v416
        %v648 = vpop.permute.xlu0 %647
        %651 = vset.pattern.permute.xlu0 0
        %652 = vperm.xlu0 %651, %v417
        %v653 = vpop.permute.xlu0 %652
        %656 = vset.pattern.permute.xlu0 0
        %657 = vperm.xlu0 %656, %v418
        %v658 = vpop.permute.xlu0 %657
        %661 = vset.pattern.permute.xlu0 0
        %662 = vperm.xlu0 %661, %v419
        %v663 = vpop.permute.xlu0 %662
        %666 = vset.pattern.permute.xlu0 0
        %667 = vperm.xlu0 %666, %v420
        %v668 = vpop.permute.xlu0 %667
        %671 = vset.pattern.permute.xlu0 0
        %672 = vperm.xlu0 %671, %v421
        %v673 = vpop.permute.xlu0 %672
        %676 = vset.pattern.permute.xlu0 0
        %677 = vperm.xlu0 %676, %v422
        %v678 = vpop.permute.xlu0 %677
        %v681 = vlaneseq
        %v682 = vshrl.u32 %v681, 7
        %v683 = vsub.s32 0, %v682
        %v684 = vrot.slane %v519, %v683
        %v685 = vlaneseq
        %v686 = vshrl.u32 %v685, 7
        %v687 = vsub.s32 1, %v686
        %v688 = vrot.slane %v519, %v687
        %v691 = vmul.f32 %v523, %v684
        %v692 = vmul.f32 %v523, %v688
        %v693 = vmul.f32 %v528, %v684
        %v694 = vmul.f32 %v528, %v688
        %v695 = vmul.f32 %v533, %v684
        %v696 = vmul.f32 %v533, %v688
        %v697 = vmul.f32 %v538, %v684
        %v698 = vmul.f32 %v538, %v688
        %v699 = vmul.f32 %v543, %v684
        %v700 = vmul.f32 %v543, %v688
        %v701 = vmul.f32 %v548, %v684
        %v702 = vmul.f32 %v548, %v688
        %v703 = vmul.f32 %v553, %v684
        %v704 = vmul.f32 %v553, %v688
        %v705 = vmul.f32 %v558, %v684
        %v706 = vmul.f32 %v558, %v688
        %v707 = vmul.f32 %v563, %v684
        %v708 = vmul.f32 %v563, %v688
        %v709 = vmul.f32 %v568, %v684
        %v710 = vmul.f32 %v568, %v688
        %v711 = vmul.f32 %v573, %v684
        %v712 = vmul.f32 %v573, %v688
        %v713 = vmul.f32 %v578, %v684
        %v714 = vmul.f32 %v578, %v688
        %v715 = vmul.f32 %v583, %v684
        %v716 = vmul.f32 %v583, %v688
        %v717 = vmul.f32 %v588, %v684
        %v718 = vmul.f32 %v588, %v688
        %v719 = vmul.f32 %v593, %v684
        %v720 = vmul.f32 %v593, %v688
        %v721 = vmul.f32 %v598, %v684
        %v722 = vmul.f32 %v598, %v688
        %v723 = vmul.f32 %v603, %v684
        %v724 = vmul.f32 %v603, %v688
        %v725 = vmul.f32 %v608, %v684
        %v726 = vmul.f32 %v608, %v688
        %v727 = vmul.f32 %v613, %v684
        %v728 = vmul.f32 %v613, %v688
        %v729 = vmul.f32 %v618, %v684
        %v730 = vmul.f32 %v618, %v688
        %v731 = vmul.f32 %v623, %v684
        %v732 = vmul.f32 %v623, %v688
        %v733 = vmul.f32 %v628, %v684
        %v734 = vmul.f32 %v628, %v688
        %v735 = vmul.f32 %v633, %v684
        %v736 = vmul.f32 %v633, %v688
        %v737 = vmul.f32 %v638, %v684
        %v738 = vmul.f32 %v638, %v688
        %v739 = vmul.f32 %v643, %v684
        %v740 = vmul.f32 %v643, %v688
        %v741 = vmul.f32 %v648, %v684
        %v742 = vmul.f32 %v648, %v688
        %v743 = vmul.f32 %v653, %v684
        %v744 = vmul.f32 %v653, %v688
        %v745 = vmul.f32 %v658, %v684
        %v746 = vmul.f32 %v658, %v688
        %v747 = vmul.f32 %v663, %v684
        %v748 = vmul.f32 %v663, %v688
        %v749 = vmul.f32 %v668, %v684
        %v750 = vmul.f32 %v668, %v688
        %v751 = vmul.f32 %v673, %v684
        %v752 = vmul.f32 %v673, %v688
        %v753 = vmul.f32 %v678, %v684
        %v754 = vmul.f32 %v678, %v688
        %755 = vmatprep.subr.mxu0 %v488
        %756 = vmatpush1.msra.mxu0 %v487
        %757 = vmatprep.subr.mxu0 %v490
        %758 = vmatpush1.msra.mxu0 %v489
        %759 = vmatprep.subr.mxu0 %v492
        %760 = vmatpush1.msra.mxu0 %v491
        %761 = vmatprep.subr.mxu0 %v494
        %762 = vmatpush1.msra.mxu0 %v493
        %763 = vmatprep.subr.mxu0 %v496
        %764 = vmatpush1.msra.mxu0 %v495
        %765 = vmatprep.subr.mxu0 %v498
        %766 = vmatpush1.msra.mxu0 %v497
        %767 = vmatprep.subr.mxu0 %v500
        %768 = vmatpush1.msra.mxu0 %v499
        %769 = vmatprep.subr.mxu0 %v502
        %770 = vmatpush1.msra.mxu0 %v501
        %771 = vmatprep.subr.mxu0 %v504
        %772 = vmatpush1.msra.mxu0 %v503
        %773 = vmatprep.subr.mxu0 %v506
        %774 = vmatpush1.msra.mxu0 %v505
        %775 = vmatprep.subr.mxu0 %v508
        %776 = vmatpush1.msra.mxu0 %v507
        %777 = vmatprep.subr.mxu0 %v510
        %778 = vmatpush1.msra.mxu0 %v509
        %779 = vmatprep.subr.mxu0 %v512
        %780 = vmatpush1.msra.mxu0 %v511
        %781 = vmatprep.subr.mxu0 %v514
        %782 = vmatpush1.msra.mxu0 %v513
        %783 = vmatprep.subr.mxu0 %v516
        %784 = vmatpush1.msra.mxu0 %v515
        %785 = vmatprep.subr.mxu0 %v518
        %786 = vmatpush1.msra.mxu0 %v517
        %787 = vmatprep.subr.mxu0 0.0
        %788 = vmatpush1.msra.mxu0 0.0
        %789 = vmatprep.subr.mxu0 0.0
        %790 = vmatpush1.msra.mxu0 0.0
        %791 = vmatprep.subr.mxu0 0.0
        %792 = vmatpush1.msra.mxu0 0.0
        %793 = vmatprep.subr.mxu0 0.0
        %794 = vmatpush1.msra.mxu0 0.0
        %795 = vmatprep.subr.mxu0 0.0
        %796 = vmatpush1.msra.mxu0 0.0
        %797 = vmatprep.subr.mxu0 0.0
        %798 = vmatpush1.msra.mxu0 0.0
        %799 = vmatprep.subr.mxu0 0.0
        %800 = vmatpush1.msra.mxu0 0.0
        %801 = vmatprep.subr.mxu0 0.0
        %802 = vmatpush1.msra.mxu0 0.0
        %803 = vmatprep.subr.mxu0 0.0
        %804 = vmatpush1.msra.mxu0 0.0
        %805 = vmatprep.subr.mxu0 0.0
        %806 = vmatpush1.msra.mxu0 0.0
        %807 = vmatprep.subr.mxu0 0.0
        %808 = vmatpush1.msra.mxu0 0.0
        %809 = vmatprep.subr.mxu0 0.0
        %810 = vmatpush1.msra.mxu0 0.0
        %811 = vmatprep.subr.mxu0 0.0
        %812 = vmatpush1.msra.mxu0 0.0
        %813 = vmatprep.subr.mxu0 0.0
        %814 = vmatpush1.msra.mxu0 0.0
        %815 = vmatprep.subr.mxu0 0.0
        %816 = vmatpush1.msra.mxu0 0.0
        %817 = vmatprep.subr.mxu0 0.0
        %818 = vmatpush1.msra.mxu0 0.0
        %819 = vmatprep.mubr.f32.mxu0 0.0
        %820 = vmatmul.mubr.f32.gmra.mrb[0].mxu0 %v359
        %v821 = vpop.f32.mrb[0].mxu0
        %v822 = vadd.f32 %v691, %v821
        %v823 = vpop.f32.mrb[0].mxu0
        %v824 = vadd.f32 %v692, %v823
        %825 = vmatprep.mubr.f32.mxu0 0.0
        %826 = vmatmul.mubr.f32.gmra.mrb[0].mxu0 %v360
        %v827 = vpop.f32.mrb[0].mxu0
        %v828 = vadd.f32 %v693, %v827
        %v829 = vpop.f32.mrb[0].mxu0
        %v830 = vadd.f32 %v694, %v829
        %831 = vmatprep.mubr.f32.mxu0 0.0
        %832 = vmatmul.mubr.f32.gmra.mrb[0].mxu0 %v361
        %v833 = vpop.f32.mrb[0].mxu0
        %v834 = vadd.f32 %v695, %v833
        %v835 = vpop.f32.mrb[0].mxu0
        %v836 = vadd.f32 %v696, %v835
        %837 = vmatprep.mubr.f32.mxu0 0.0
        %838 = vmatmul.mubr.f32.gmra.mrb[0].mxu0 %v362
        %v839 = vpop.f32.mrb[0].mxu0
        %v840 = vadd.f32 %v697, %v839
        %v841 = vpop.f32.mrb[0].mxu0
        %v842 = vadd.f32 %v698, %v841
        %843 = vmatprep.mubr.f32.mxu0 0.0
        %844 = vmatmul.mubr.f32.gmra.mrb[0].mxu0 %v363
        %v845 = vpop.f32.mrb[0].mxu0
        %v846 = vadd.f32 %v699, %v845
        %v847 = vpop.f32.mrb[0].mxu0
        %v848 = vadd.f32 %v700, %v847
        %849 = vmatprep.mubr.f32.mxu0 0.0
        %850 = vmatmul.mubr.f32.gmra.mrb[0].mxu0 %v364
        %v851 = vpop.f32.mrb[0].mxu0
        %v852 = vadd.f32 %v701, %v851
        %v853 = vpop.f32.mrb[0].mxu0
        %v854 = vadd.f32 %v702, %v853
        %855 = vmatprep.mubr.f32.mxu0 0.0
        %856 = vmatmul.mubr.f32.gmra.mrb[0].mxu0 %v365
        %v857 = vpop.f32.mrb[0].mxu0
        %v858 = vadd.f32 %v703, %v857
        %v859 = vpop.f32.mrb[0].mxu0
        %v860 = vadd.f32 %v704, %v859
        %861 = vmatprep.mubr.f32.mxu0 0.0
        %862 = vmatmul.mubr.f32.gmra.mrb[0].mxu0 %v366
        %v863 = vpop.f32.mrb[0].mxu0
        %v864 = vadd.f32 %v705, %v863
        %v865 = vpop.f32.mrb[0].mxu0
        %v866 = vadd.f32 %v706, %v865
        %867 = vmatprep.mubr.f32.mxu0 0.0
        %868 = vmatmul.mubr.f32.gmra.mrb[0].mxu0 %v367
        %v869 = vpop.f32.mrb[0].mxu0
        %v870 = vadd.f32 %v707, %v869
        %v871 = vpop.f32.mrb[0].mxu0
        %v872 = vadd.f32 %v708, %v871
        %873 = vmatprep.mubr.f32.mxu0 0.0
        %874 = vmatmul.mubr.f32.gmra.mrb[0].mxu0 %v368
        %v875 = vpop.f32.mrb[0].mxu0
        %v876 = vadd.f32 %v709, %v875
        %v877 = vpop.f32.mrb[0].mxu0
        %v878 = vadd.f32 %v710, %v877
        %879 = vmatprep.mubr.f32.mxu0 0.0
        %880 = vmatmul.mubr.f32.gmra.mrb[0].mxu0 %v369
        %v881 = vpop.f32.mrb[0].mxu0
        %v882 = vadd.f32 %v711, %v881
        %v883 = vpop.f32.mrb[0].mxu0
        %v884 = vadd.f32 %v712, %v883
        %885 = vmatprep.mubr.f32.mxu0 0.0
        %886 = vmatmul.mubr.f32.gmra.mrb[0].mxu0 %v370
        %v887 = vpop.f32.mrb[0].mxu0
        %v888 = vadd.f32 %v713, %v887
        %v889 = vpop.f32.mrb[0].mxu0
        %v890 = vadd.f32 %v714, %v889
        %891 = vmatprep.mubr.f32.mxu0 0.0
        %892 = vmatmul.mubr.f32.gmra.mrb[0].mxu0 %v371
        %v893 = vpop.f32.mrb[0].mxu0
        %v894 = vadd.f32 %v715, %v893
        %v895 = vpop.f32.mrb[0].mxu0
        %v896 = vadd.f32 %v716, %v895
        %897 = vmatprep.mubr.f32.mxu0 0.0
        %898 = vmatmul.mubr.f32.gmra.mrb[0].mxu0 %v372
        %v899 = vpop.f32.mrb[0].mxu0
        %v900 = vadd.f32 %v717, %v899
        %v901 = vpop.f32.mrb[0].mxu0
        %v902 = vadd.f32 %v718, %v901
        %903 = vmatprep.mubr.f32.mxu0 0.0
        %904 = vmatmul.mubr.f32.gmra.mrb[0].mxu0 %v373
        %v905 = vpop.f32.mrb[0].mxu0
        %v906 = vadd.f32 %v719, %v905
        %v907 = vpop.f32.mrb[0].mxu0
        %v908 = vadd.f32 %v720, %v907
        %909 = vmatprep.mubr.f32.mxu0 0.0
        %910 = vmatmul.mubr.f32.gmra.mrb[0].mxu0 %v374
        %v911 = vpop.f32.mrb[0].mxu0
        %v912 = vadd.f32 %v721, %v911
        %v913 = vpop.f32.mrb[0].mxu0
        %v914 = vadd.f32 %v722, %v913
        %915 = vmatprep.mubr.f32.mxu0 0.0
        %916 = vmatmul.mubr.f32.gmra.mrb[0].mxu0 %v375
        %v917 = vpop.f32.mrb[0].mxu0
        %v918 = vadd.f32 %v723, %v917
        %v919 = vpop.f32.mrb[0].mxu0
        %v920 = vadd.f32 %v724, %v919
        %921 = vmatprep.mubr.f32.mxu0 0.0
        %922 = vmatmul.mubr.f32.gmra.mrb[0].mxu0 %v376
        %v923 = vpop.f32.mrb[0].mxu0
        %v924 = vadd.f32 %v725, %v923
        %v925 = vpop.f32.mrb[0].mxu0
        %v926 = vadd.f32 %v726, %v925
        %927 = vmatprep.mubr.f32.mxu0 0.0
        %928 = vmatmul.mubr.f32.gmra.mrb[0].mxu0 %v377
        %v929 = vpop.f32.mrb[0].mxu0
        %v930 = vadd.f32 %v727, %v929
        %v931 = vpop.f32.mrb[0].mxu0
        %v932 = vadd.f32 %v728, %v931
        %933 = vmatprep.mubr.f32.mxu0 0.0
        %934 = vmatmul.mubr.f32.gmra.mrb[0].mxu0 %v378
        %v935 = vpop.f32.mrb[0].mxu0
        %v936 = vadd.f32 %v729, %v935
        %v937 = vpop.f32.mrb[0].mxu0
        %v938 = vadd.f32 %v730, %v937
        %939 = vmatprep.mubr.f32.mxu0 0.0
        %940 = vmatmul.mubr.f32.gmra.mrb[0].mxu0 %v379
        %v941 = vpop.f32.mrb[0].mxu0
        %v942 = vadd.f32 %v731, %v941
        %v943 = vpop.f32.mrb[0].mxu0
        %v944 = vadd.f32 %v732, %v943
        %945 = vmatprep.mubr.f32.mxu0 0.0
        %946 = vmatmul.mubr.f32.gmra.mrb[0].mxu0 %v380
        %v947 = vpop.f32.mrb[0].mxu0
        %v948 = vadd.f32 %v733, %v947
        %v949 = vpop.f32.mrb[0].mxu0
        %v950 = vadd.f32 %v734, %v949
        %951 = vmatprep.mubr.f32.mxu0 0.0
        %952 = vmatmul.mubr.f32.gmra.mrb[0].mxu0 %v381
        %v953 = vpop.f32.mrb[0].mxu0
        %v954 = vadd.f32 %v735, %v953
        %v955 = vpop.f32.mrb[0].mxu0
        %v956 = vadd.f32 %v736, %v955
        %957 = vmatprep.mubr.f32.mxu0 0.0
        %958 = vmatmul.mubr.f32.gmra.mrb[0].mxu0 %v382
        %v959 = vpop.f32.mrb[0].mxu0
        %v960 = vadd.f32 %v737, %v959
        %v961 = vpop.f32.mrb[0].mxu0
        %v962 = vadd.f32 %v738, %v961
        %963 = vmatprep.mubr.f32.mxu0 0.0
        %964 = vmatmul.mubr.f32.gmra.mrb[0].mxu0 %v383
        %v965 = vpop.f32.mrb[0].mxu0
        %v966 = vadd.f32 %v739, %v965
        %v967 = vpop.f32.mrb[0].mxu0
        %v968 = vadd.f32 %v740, %v967
        %969 = vmatprep.mubr.f32.mxu0 0.0
        %970 = vmatmul.mubr.f32.gmra.mrb[0].mxu0 %v384
        %v971 = vpop.f32.mrb[0].mxu0
        %v972 = vadd.f32 %v741, %v971
        %v973 = vpop.f32.mrb[0].mxu0
        %v974 = vadd.f32 %v742, %v973
        %975 = vmatprep.mubr.f32.mxu0 0.0
        %976 = vmatmul.mubr.f32.gmra.mrb[0].mxu0 %v385
        %v977 = vpop.f32.mrb[0].mxu0
        %v978 = vadd.f32 %v743, %v977
        %v979 = vpop.f32.mrb[0].mxu0
        %v980 = vadd.f32 %v744, %v979
        %981 = vmatprep.mubr.f32.mxu0 0.0
        %982 = vmatmul.mubr.f32.gmra.mrb[0].mxu0 %v386
        %v983 = vpop.f32.mrb[0].mxu0
        %v984 = vadd.f32 %v745, %v983
        %v985 = vpop.f32.mrb[0].mxu0
        %v986 = vadd.f32 %v746, %v985
        %987 = vmatprep.mubr.f32.mxu0 0.0
        %988 = vmatmul.mubr.f32.gmra.mrb[0].mxu0 %v387
        %v989 = vpop.f32.mrb[0].mxu0
        %v990 = vadd.f32 %v747, %v989
        %v991 = vpop.f32.mrb[0].mxu0
        %v992 = vadd.f32 %v748, %v991
        %993 = vmatprep.mubr.f32.mxu0 0.0
        %994 = vmatmul.mubr.f32.gmra.mrb[0].mxu0 %v388
        %v995 = vpop.f32.mrb[0].mxu0
        %v996 = vadd.f32 %v749, %v995
        %v997 = vpop.f32.mrb[0].mxu0
        %v998 = vadd.f32 %v750, %v997
        %999 = vmatprep.mubr.f32.mxu0 0.0
        %1000 = vmatmul.mubr.f32.gmra.mrb[0].mxu0 %v389
        %v1001 = vpop.f32.mrb[0].mxu0
        %v1002 = vadd.f32 %v751, %v1001
        %v1003 = vpop.f32.mrb[0].mxu0
        %v1004 = vadd.f32 %v752, %v1003
        %1005 = vmatprep.mubr.f32.mxu0 0.0
        %1006 = vmatmul.mubr.f32.gmra.mrb[0].mxu0 %v390
        %v1007 = vpop.f32.mrb[0].mxu0
        %v1008 = vadd.f32 %v753, %v1007
        %v1009 = vpop.f32.mrb[0].mxu0
        %v1010 = vadd.f32 %v754, %v1009
        %1011 = vdwg.mxu0
        %v1012 = vld [vmem:[%s4] sm:$0x3]
        %v1014 = vlaneseq
        %v1015 = vshrl.u32 %v1014, 7
        %v1016 = vsub.s32 0, %v1015
        %v1017 = vrot.slane %v1012, %v1016
        %v1018 = vlaneseq
        %v1019 = vshrl.u32 %v1018, 7
        %v1020 = vsub.s32 1, %v1019
        %v1021 = vrot.slane %v1012, %v1020
        %v1024 = vadd.f32 %v822, %v1017
        %v1025 = vadd.f32 %v824, %v1021
        %v1026 = vadd.f32 %v828, %v1017
        %v1027 = vadd.f32 %v830, %v1021
        %v1028 = vadd.f32 %v834, %v1017
        %v1029 = vadd.f32 %v836, %v1021
        %v1030 = vadd.f32 %v840, %v1017
        %v1031 = vadd.f32 %v842, %v1021
        %v1032 = vadd.f32 %v846, %v1017
        %v1033 = vadd.f32 %v848, %v1021
        %v1034 = vadd.f32 %v852, %v1017
        %v1035 = vadd.f32 %v854, %v1021
        %v1036 = vadd.f32 %v858, %v1017
        %v1037 = vadd.f32 %v860, %v1021
        %v1038 = vadd.f32 %v864, %v1017
        %v1039 = vadd.f32 %v866, %v1021
        %v1040 = vadd.f32 %v870, %v1017
        %v1041 = vadd.f32 %v872, %v1021
        %v1042 = vadd.f32 %v876, %v1017
        %v1043 = vadd.f32 %v878, %v1021
        %v1044 = vadd.f32 %v882, %v1017
        %v1045 = vadd.f32 %v884, %v1021
        %v1046 = vadd.f32 %v888, %v1017
        %v1047 = vadd.f32 %v890, %v1021
        %v1048 = vadd.f32 %v894, %v1017
        %v1049 = vadd.f32 %v896, %v1021
        %v1050 = vadd.f32 %v900, %v1017
        %v1051 = vadd.f32 %v902, %v1021
        %v1052 = vadd.f32 %v906, %v1017
        %v1053 = vadd.f32 %v908, %v1021
        %v1054 = vadd.f32 %v912, %v1017
        %v1055 = vadd.f32 %v914, %v1021
        %v1056 = vadd.f32 %v918, %v1017
        %v1057 = vadd.f32 %v920, %v1021
        %v1058 = vadd.f32 %v924, %v1017
        %v1059 = vadd.f32 %v926, %v1021
        %v1060 = vadd.f32 %v930, %v1017
        %v1061 = vadd.f32 %v932, %v1021
        %v1062 = vadd.f32 %v936, %v1017
        %v1063 = vadd.f32 %v938, %v1021
        %v1064 = vadd.f32 %v942, %v1017
        %v1065 = vadd.f32 %v944, %v1021
        %v1066 = vadd.f32 %v948, %v1017
        %v1067 = vadd.f32 %v950, %v1021
        %v1068 = vadd.f32 %v954, %v1017
        %v1069 = vadd.f32 %v956, %v1021
        %v1070 = vadd.f32 %v960, %v1017
        %v1071 = vadd.f32 %v962, %v1021
        %v1072 = vadd.f32 %v966, %v1017
        %v1073 = vadd.f32 %v968, %v1021
        %v1074 = vadd.f32 %v972, %v1017
        %v1075 = vadd.f32 %v974, %v1021
        %v1076 = vadd.f32 %v978, %v1017
        %v1077 = vadd.f32 %v980, %v1021
        %v1078 = vadd.f32 %v984, %v1017
        %v1079 = vadd.f32 %v986, %v1021
        %v1080 = vadd.f32 %v990, %v1017
        %v1081 = vadd.f32 %v992, %v1021
        %v1082 = vadd.f32 %v996, %v1017
        %v1083 = vadd.f32 %v998, %v1021
        %v1084 = vadd.f32 %v1002, %v1017
        %v1085 = vadd.f32 %v1004, %v1021
        %v1086 = vadd.f32 %v1008, %v1017
        %v1087 = vadd.f32 %v1010, %v1021
        %v1088 = vmax.f32 %v1024, 0.0
        %v1089 = vmax.f32 %v1025, 0.0
        %v1090 = vmax.f32 %v1026, 0.0
        %v1091 = vmax.f32 %v1027, 0.0
        %v1092 = vmax.f32 %v1028, 0.0
        %v1093 = vmax.f32 %v1029, 0.0
        %v1094 = vmax.f32 %v1030, 0.0
        %v1095 = vmax.f32 %v1031, 0.0
        %v1096 = vmax.f32 %v1032, 0.0
        %v1097 = vmax.f32 %v1033, 0.0
        %v1098 = vmax.f32 %v1034, 0.0
        %v1099 = vmax.f32 %v1035, 0.0
        %v1100 = vmax.f32 %v1036, 0.0
        %v1101 = vmax.f32 %v1037, 0.0
        %v1102 = vmax.f32 %v1038, 0.0
        %v1103 = vmax.f32 %v1039, 0.0
        %v1104 = vmax.f32 %v1040, 0.0
        %v1105 = vmax.f32 %v1041, 0.0
        %v1106 = vmax.f32 %v1042, 0.0
        %v1107 = vmax.f32 %v1043, 0.0
        %v1108 = vmax.f32 %v1044, 0.0
        %v1109 = vmax.f32 %v1045, 0.0
        %v1110 = vmax.f32 %v1046, 0.0
        %v1111 = vmax.f32 %v1047, 0.0
        %v1112 = vmax.f32 %v1048, 0.0
        %v1113 = vmax.f32 %v1049, 0.0
        %v1114 = vmax.f32 %v1050, 0.0
        %v1115 = vmax.f32 %v1051, 0.0
        %v1116 = vmax.f32 %v1052, 0.0
        %v1117 = vmax.f32 %v1053, 0.0
        %v1118 = vmax.f32 %v1054, 0.0
        %v1119 = vmax.f32 %v1055, 0.0
        %v1120 = vmax.f32 %v1056, 0.0
        %v1121 = vmax.f32 %v1057, 0.0
        %v1122 = vmax.f32 %v1058, 0.0
        %v1123 = vmax.f32 %v1059, 0.0
        %v1124 = vmax.f32 %v1060, 0.0
        %v1125 = vmax.f32 %v1061, 0.0
        %v1126 = vmax.f32 %v1062, 0.0
        %v1127 = vmax.f32 %v1063, 0.0
        %v1128 = vmax.f32 %v1064, 0.0
        %v1129 = vmax.f32 %v1065, 0.0
        %v1130 = vmax.f32 %v1066, 0.0
        %v1131 = vmax.f32 %v1067, 0.0
        %v1132 = vmax.f32 %v1068, 0.0
        %v1133 = vmax.f32 %v1069, 0.0
        %v1134 = vmax.f32 %v1070, 0.0
        %v1135 = vmax.f32 %v1071, 0.0
        %v1136 = vmax.f32 %v1072, 0.0
        %v1137 = vmax.f32 %v1073, 0.0
        %v1138 = vmax.f32 %v1074, 0.0
        %v1139 = vmax.f32 %v1075, 0.0
        %v1140 = vmax.f32 %v1076, 0.0
        %v1141 = vmax.f32 %v1077, 0.0
        %v1142 = vmax.f32 %v1078, 0.0
        %v1143 = vmax.f32 %v1079, 0.0
        %v1144 = vmax.f32 %v1080, 0.0
        %v1145 = vmax.f32 %v1081, 0.0
        %v1146 = vmax.f32 %v1082, 0.0
        %v1147 = vmax.f32 %v1083, 0.0
        %v1148 = vmax.f32 %v1084, 0.0
        %v1149 = vmax.f32 %v1085, 0.0
        %v1150 = vmax.f32 %v1086, 0.0
        %v1151 = vmax.f32 %v1087, 0.0
        %v1152 = vsub.f32 0.0, %v455
        %v1153 = vsub.f32 0.0, %v456
        %v1154 = vsub.f32 0.0, %v457
        %v1155 = vsub.f32 0.0, %v458
        %v1156 = vsub.f32 0.0, %v459
        %v1157 = vsub.f32 0.0, %v460
        %v1158 = vsub.f32 0.0, %v461
        %v1159 = vsub.f32 0.0, %v462
        %v1160 = vsub.f32 0.0, %v463
        %v1161 = vsub.f32 0.0, %v464
        %v1162 = vsub.f32 0.0, %v465
        %v1163 = vsub.f32 0.0, %v466
        %v1164 = vsub.f32 0.0, %v467
        %v1165 = vsub.f32 0.0, %v468
        %v1166 = vsub.f32 0.0, %v469
        %v1167 = vsub.f32 0.0, %v470
        %v1168 = vsub.f32 0.0, %v471
        %v1169 = vsub.f32 0.0, %v472
        %v1170 = vsub.f32 0.0, %v473
        %v1171 = vsub.f32 0.0, %v474
        %v1172 = vsub.f32 0.0, %v475
        %v1173 = vsub.f32 0.0, %v476
        %v1174 = vsub.f32 0.0, %v477
        %v1175 = vsub.f32 0.0, %v478
        %v1176 = vsub.f32 0.0, %v479
        %v1177 = vsub.f32 0.0, %v480
        %v1178 = vsub.f32 0.0, %v481
        %v1179 = vsub.f32 0.0, %v482
        %v1180 = vsub.f32 0.0, %v483
        %v1181 = vsub.f32 0.0, %v484
        %v1182 = vsub.f32 0.0, %v485
        %v1183 = vsub.f32 0.0, %v486
        %1185 = vset.pattern.permute.xlu0 0
        %1186 = vperm.xlu0 %1185, %v1152
        %v1187 = vpop.permute.xlu0 %1186
        %1190 = vset.pattern.permute.xlu0 0
        %1191 = vperm.xlu0 %1190, %v1153
        %v1192 = vpop.permute.xlu0 %1191
        %1195 = vset.pattern.permute.xlu0 0
        %1196 = vperm.xlu0 %1195, %v1154
        %v1197 = vpop.permute.xlu0 %1196
        %1200 = vset.pattern.permute.xlu0 0
        %1201 = vperm.xlu0 %1200, %v1155
        %v1202 = vpop.permute.xlu0 %1201
        %1205 = vset.pattern.permute.xlu0 0
        %1206 = vperm.xlu0 %1205, %v1156
        %v1207 = vpop.permute.xlu0 %1206
        %1210 = vset.pattern.permute.xlu0 0
        %1211 = vperm.xlu0 %1210, %v1157
        %v1212 = vpop.permute.xlu0 %1211
        %1215 = vset.pattern.permute.xlu0 0
        %1216 = vperm.xlu0 %1215, %v1158
        %v1217 = vpop.permute.xlu0 %1216
        %1220 = vset.pattern.permute.xlu0 0
        %1221 = vperm.xlu0 %1220, %v1159
        %v1222 = vpop.permute.xlu0 %1221
        %1225 = vset.pattern.permute.xlu0 0
        %1226 = vperm.xlu0 %1225, %v1160
        %v1227 = vpop.permute.xlu0 %1226
        %1230 = vset.pattern.permute.xlu0 0
        %1231 = vperm.xlu0 %1230, %v1161
        %v1232 = vpop.permute.xlu0 %1231
        %1235 = vset.pattern.permute.xlu0 0
        %1236 = vperm.xlu0 %1235, %v1162
        %v1237 = vpop.permute.xlu0 %1236
        %1240 = vset.pattern.permute.xlu0 0
        %1241 = vperm.xlu0 %1240, %v1163
        %v1242 = vpop.permute.xlu0 %1241
        %1245 = vset.pattern.permute.xlu0 0
        %1246 = vperm.xlu0 %1245, %v1164
        %v1247 = vpop.permute.xlu0 %1246
        %1250 = vset.pattern.permute.xlu0 0
        %1251 = vperm.xlu0 %1250, %v1165
        %v1252 = vpop.permute.xlu0 %1251
        %1255 = vset.pattern.permute.xlu0 0
        %1256 = vperm.xlu0 %1255, %v1166
        %v1257 = vpop.permute.xlu0 %1256
        %1260 = vset.pattern.permute.xlu0 0
        %1261 = vperm.xlu0 %1260, %v1167
        %v1262 = vpop.permute.xlu0 %1261
        %1265 = vset.pattern.permute.xlu0 0
        %1266 = vperm.xlu0 %1265, %v1168
        %v1267 = vpop.permute.xlu0 %1266
        %1270 = vset.pattern.permute.xlu0 0
        %1271 = vperm.xlu0 %1270, %v1169
        %v1272 = vpop.permute.xlu0 %1271
        %1275 = vset.pattern.permute.xlu0 0
        %1276 = vperm.xlu0 %1275, %v1170
        %v1277 = vpop.permute.xlu0 %1276
        %1280 = vset.pattern.permute.xlu0 0
        %1281 = vperm.xlu0 %1280, %v1171
        %v1282 = vpop.permute.xlu0 %1281
        %1285 = vset.pattern.permute.xlu0 0
        %1286 = vperm.xlu0 %1285, %v1172
        %v1287 = vpop.permute.xlu0 %1286
        %1290 = vset.pattern.permute.xlu0 0
        %1291 = vperm.xlu0 %1290, %v1173
        %v1292 = vpop.permute.xlu0 %1291
        %1295 = vset.pattern.permute.xlu0 0
        %1296 = vperm.xlu0 %1295, %v1174
        %v1297 = vpop.permute.xlu0 %1296
        %1300 = vset.pattern.permute.xlu0 0
        %1301 = vperm.xlu0 %1300, %v1175
        %v1302 = vpop.permute.xlu0 %1301
        %1305 = vset.pattern.permute.xlu0 0
        %1306 = vperm.xlu0 %1305, %v1176
        %v1307 = vpop.permute.xlu0 %1306
        %1310 = vset.pattern.permute.xlu0 0
        %1311 = vperm.xlu0 %1310, %v1177
        %v1312 = vpop.permute.xlu0 %1311
        %1315 = vset.pattern.permute.xlu0 0
        %1316 = vperm.xlu0 %1315, %v1178
        %v1317 = vpop.permute.xlu0 %1316
        %1320 = vset.pattern.permute.xlu0 0
        %1321 = vperm.xlu0 %1320, %v1179
        %v1322 = vpop.permute.xlu0 %1321
        %1325 = vset.pattern.permute.xlu0 0
        %1326 = vperm.xlu0 %1325, %v1180
        %v1327 = vpop.permute.xlu0 %1326
        %1330 = vset.pattern.permute.xlu0 0
        %1331 = vperm.xlu0 %1330, %v1181
        %v1332 = vpop.permute.xlu0 %1331
        %1335 = vset.pattern.permute.xlu0 0
        %1336 = vperm.xlu0 %1335, %v1182
        %v1337 = vpop.permute.xlu0 %1336
        %1340 = vset.pattern.permute.xlu0 0
        %1341 = vperm.xlu0 %1340, %v1183
        %v1342 = vpop.permute.xlu0 %1341
        %v1344 = vmul.f32 %v1187, %v1089
        %v1345 = vmul.f32 %v1192, %v1091
        %v1346 = vmul.f32 %v1197, %v1093
        %v1347 = vmul.f32 %v1202, %v1095
        %v1348 = vmul.f32 %v1207, %v1097
        %v1349 = vmul.f32 %v1212, %v1099
        %v1350 = vmul.f32 %v1217, %v1101
        %v1351 = vmul.f32 %v1222, %v1103
        %v1352 = vmul.f32 %v1227, %v1105
        %v1353 = vmul.f32 %v1232, %v1107
        %v1354 = vmul.f32 %v1237, %v1109
        %v1355 = vmul.f32 %v1242, %v1111
        %v1356 = vmul.f32 %v1247, %v1113
        %v1357 = vmul.f32 %v1252, %v1115
        %v1358 = vmul.f32 %v1257, %v1117
        %v1359 = vmul.f32 %v1262, %v1119
        %v1360 = vmul.f32 %v1267, %v1121
        %v1361 = vmul.f32 %v1272, %v1123
        %v1362 = vmul.f32 %v1277, %v1125
        %v1363 = vmul.f32 %v1282, %v1127
        %v1364 = vmul.f32 %v1287, %v1129
        %v1365 = vmul.f32 %v1292, %v1131
        %v1366 = vmul.f32 %v1297, %v1133
        %v1367 = vmul.f32 %v1302, %v1135
        %v1368 = vmul.f32 %v1307, %v1137
        %v1369 = vmul.f32 %v1312, %v1139
        %v1370 = vmul.f32 %v1317, %v1141
        %v1371 = vmul.f32 %v1322, %v1143
        %v1372 = vmul.f32 %v1327, %v1145
        %v1373 = vmul.f32 %v1332, %v1147
        %v1374 = vmul.f32 %v1337, %v1149
        %v1375 = vmul.f32 %v1342, %v1151
        %v1376 = vld [vmem:[#allocation5] sm:$0xff]
        %v1377 = vld [vmem:[#allocation5 + $0x8] sm:$0xff]
        %v1378 = vld [vmem:[#allocation5 + $0x10] sm:$0xff]
        %v1379 = vld [vmem:[#allocation5 + $0x18] sm:$0xff]
        %v1380 = vld [vmem:[#allocation5 + $0x20] sm:$0xff]
        %v1381 = vld [vmem:[#allocation5 + $0x28] sm:$0xff]
        %v1382 = vld [vmem:[#allocation5 + $0x30] sm:$0xff]
        %v1383 = vld [vmem:[#allocation5 + $0x38] sm:$0xff]
        %v1384 = vld [vmem:[#allocation5 + $0x40] sm:$0xff]
        %v1385 = vld [vmem:[#allocation5 + $0x48] sm:$0xff]
        %v1386 = vld [vmem:[#allocation5 + $0x50] sm:$0xff]
        %v1387 = vld [vmem:[#allocation5 + $0x58] sm:$0xff]
        %v1388 = vld [vmem:[#allocation5 + $0x60] sm:$0xff]
        %v1389 = vld [vmem:[#allocation5 + $0x68] sm:$0xff]
        %v1390 = vld [vmem:[#allocation5 + $0x70] sm:$0xff]
        %v1391 = vld [vmem:[#allocation5 + $0x78] sm:$0xff]
        %v1392 = vld [vmem:[#allocation5 + $0x80] sm:$0xff]
        %v1393 = vld [vmem:[#allocation5 + $0x88] sm:$0xff]
        %v1394 = vld [vmem:[#allocation5 + $0x90] sm:$0xff]
        %v1395 = vld [vmem:[#allocation5 + $0x98] sm:$0xff]
        %v1396 = vld [vmem:[#allocation5 + $0xa0] sm:$0xff]
        %v1397 = vld [vmem:[#allocation5 + $0xa8] sm:$0xff]
        %v1398 = vld [vmem:[#allocation5 + $0xb0] sm:$0xff]
        %v1399 = vld [vmem:[#allocation5 + $0xb8] sm:$0xff]
        %v1400 = vld [vmem:[#allocation5 + $0xc0] sm:$0xff]
        %v1401 = vld [vmem:[#allocation5 + $0xc8] sm:$0xff]
        %v1402 = vld [vmem:[#allocation5 + $0xd0] sm:$0xff]
        %v1403 = vld [vmem:[#allocation5 + $0xd8] sm:$0xff]
        %v1404 = vld [vmem:[#allocation5 + $0xe0] sm:$0xff]
        %v1405 = vld [vmem:[#allocation5 + $0xe8] sm:$0xff]
        %v1406 = vld [vmem:[#allocation5 + $0xf0] sm:$0xff]
        %v1407 = vld [vmem:[#allocation5 + $0xf8] sm:$0xff]
        %v1408 = vld [vmem:[%s6] sm:$0x1]
        %v1410 = vlaneseq
        %v1411 = vshrl.u32 %v1410, 7
        %v1412 = vsub.s32 0, %v1411
        %v1413 = vrot.slane %v1408, %v1412
        %1415 = vmatprep.subr.mxu0 0.0
        %1416 = vmatpush1.msra.mxu0 %v1376
        %1417 = vmatprep.subr.mxu0 0.0
        %1418 = vmatpush1.msra.mxu0 %v1377
        %1419 = vmatprep.subr.mxu0 0.0
        %1420 = vmatpush1.msra.mxu0 %v1378
        %1421 = vmatprep.subr.mxu0 0.0
        %1422 = vmatpush1.msra.mxu0 %v1379
        %1423 = vmatprep.subr.mxu0 0.0
        %1424 = vmatpush1.msra.mxu0 %v1380
        %1425 = vmatprep.subr.mxu0 0.0
        %1426 = vmatpush1.msra.mxu0 %v1381
        %1427 = vmatprep.subr.mxu0 0.0
        %1428 = vmatpush1.msra.mxu0 %v1382
        %1429 = vmatprep.subr.mxu0 0.0
        %1430 = vmatpush1.msra.mxu0 %v1383
        %1431 = vmatprep.subr.mxu0 0.0
        %1432 = vmatpush1.msra.mxu0 %v1384
        %1433 = vmatprep.subr.mxu0 0.0
        %1434 = vmatpush1.msra.mxu0 %v1385
        %1435 = vmatprep.subr.mxu0 0.0
        %1436 = vmatpush1.msra.mxu0 %v1386
        %1437 = vmatprep.subr.mxu0 0.0
        %1438 = vmatpush1.msra.mxu0 %v1387
        %1439 = vmatprep.subr.mxu0 0.0
        %1440 = vmatpush1.msra.mxu0 %v1388
        %1441 = vmatprep.subr.mxu0 0.0
        %1442 = vmatpush1.msra.mxu0 %v1389
        %1443 = vmatprep.subr.mxu0 0.0
        %1444 = vmatpush1.msra.mxu0 %v1390
        %1445 = vmatprep.subr.mxu0 0.0
        %1446 = vmatpush1.msra.mxu0 %v1391
        %1447 = vmatprep.subr.mxu0 0.0
        %1448 = vmatpush1.msra.mxu0 %v1392
        %1449 = vmatprep.subr.mxu0 0.0
        %1450 = vmatpush1.msra.mxu0 %v1393
        %1451 = vmatprep.subr.mxu0 0.0
        %1452 = vmatpush1.msra.mxu0 %v1394
        %1453 = vmatprep.subr.mxu0 0.0
        %1454 = vmatpush1.msra.mxu0 %v1395
        %1455 = vmatprep.subr.mxu0 0.0
        %1456 = vmatpush1.msra.mxu0 %v1396
        %1457 = vmatprep.subr.mxu0 0.0
        %1458 = vmatpush1.msra.mxu0 %v1397
        %1459 = vmatprep.subr.mxu0 0.0
        %1460 = vmatpush1.msra.mxu0 %v1398
        %1461 = vmatprep.subr.mxu0 0.0
        %1462 = vmatpush1.msra.mxu0 %v1399
        %1463 = vmatprep.subr.mxu0 0.0
        %1464 = vmatpush1.msra.mxu0 %v1400
        %1465 = vmatprep.subr.mxu0 0.0
        %1466 = vmatpush1.msra.mxu0 %v1401
        %1467 = vmatprep.subr.mxu0 0.0
        %1468 = vmatpush1.msra.mxu0 %v1402
        %1469 = vmatprep.subr.mxu0 0.0
        %1470 = vmatpush1.msra.mxu0 %v1403
        %1471 = vmatprep.subr.mxu0 0.0
        %1472 = vmatpush1.msra.mxu0 %v1404
        %1473 = vmatprep.subr.mxu0 0.0
        %1474 = vmatpush1.msra.mxu0 %v1405
        %1475 = vmatprep.subr.mxu0 0.0
        %1476 = vmatpush1.msra.mxu0 %v1406
        %1477 = vmatprep.subr.mxu0 0.0
        %1478 = vmatpush1.msra.mxu0 %v1407
        %1479 = vmatprep.mubr.f32.mxu0 %v1344
        %1480 = vmatmul.mubr.f32.gmra.mrb[0].mxu0 %v1088
        %v1481 = vpop.f32.mrb[0].mxu0
        %v1482 = vadd.f32 %v1413, %v1481
        %v1483 = vpop.f32.mrb[0].mxu0
        %1484 = vmatprep.mubr.f32.mxu0 %v1345
        %1485 = vmatmul.mubr.f32.gmra.mrb[0].mxu0 %v1090
        %v1486 = vpop.f32.mrb[0].mxu0
        %v1487 = vadd.f32 %v1413, %v1486
        %v1488 = vpop.f32.mrb[0].mxu0
        %1489 = vmatprep.mubr.f32.mxu0 %v1346
        %1490 = vmatmul.mubr.f32.gmra.mrb[0].mxu0 %v1092
        %v1491 = vpop.f32.mrb[0].mxu0
        %v1492 = vadd.f32 %v1413, %v1491
        %v1493 = vpop.f32.mrb[0].mxu0
        %1494 = vmatprep.mubr.f32.mxu0 %v1347
        %1495 = vmatmul.mubr.f32.gmra.mrb[0].mxu0 %v1094
        %v1496 = vpop.f32.mrb[0].mxu0
        %v1497 = vadd.f32 %v1413, %v1496
        %v1498 = vpop.f32.mrb[0].mxu0
        %1499 = vmatprep.mubr.f32.mxu0 %v1348
        %1500 = vmatmul.mubr.f32.gmra.mrb[0].mxu0 %v1096
        %v1501 = vpop.f32.mrb[0].mxu0
        %v1502 = vadd.f32 %v1413, %v1501
        %v1503 = vpop.f32.mrb[0].mxu0
        %1504 = vmatprep.mubr.f32.mxu0 %v1349
        %1505 = vmatmul.mubr.f32.gmra.mrb[0].mxu0 %v1098
        %v1506 = vpop.f32.mrb[0].mxu0
        %v1507 = vadd.f32 %v1413, %v1506
        %v1508 = vpop.f32.mrb[0].mxu0
        %1509 = vmatprep.mubr.f32.mxu0 %v1350
        %1510 = vmatmul.mubr.f32.gmra.mrb[0].mxu0 %v1100
        %v1511 = vpop.f32.mrb[0].mxu0
        %v1512 = vadd.f32 %v1413, %v1511
        %v1513 = vpop.f32.mrb[0].mxu0
        %1514 = vmatprep.mubr.f32.mxu0 %v1351
        %1515 = vmatmul.mubr.f32.gmra.mrb[0].mxu0 %v1102
        %v1516 = vpop.f32.mrb[0].mxu0
        %v1517 = vadd.f32 %v1413, %v1516
        %v1518 = vpop.f32.mrb[0].mxu0
        %1519 = vmatprep.mubr.f32.mxu0 %v1352
        %1520 = vmatmul.mubr.f32.gmra.mrb[0].mxu0 %v1104
        %v1521 = vpop.f32.mrb[0].mxu0
        %v1522 = vadd.f32 %v1413, %v1521
        %v1523 = vpop.f32.mrb[0].mxu0
        %1524 = vmatprep.mubr.f32.mxu0 %v1353
        %1525 = vmatmul.mubr.f32.gmra.mrb[0].mxu0 %v1106
        %v1526 = vpop.f32.mrb[0].mxu0
        %v1527 = vadd.f32 %v1413, %v1526
        %v1528 = vpop.f32.mrb[0].mxu0
        %1529 = vmatprep.mubr.f32.mxu0 %v1354
        %1530 = vmatmul.mubr.f32.gmra.mrb[0].mxu0 %v1108
        %v1531 = vpop.f32.mrb[0].mxu0
        %v1532 = vadd.f32 %v1413, %v1531
        %v1533 = vpop.f32.mrb[0].mxu0
        %1534 = vmatprep.mubr.f32.mxu0 %v1355
        %1535 = vmatmul.mubr.f32.gmra.mrb[0].mxu0 %v1110
        %v1536 = vpop.f32.mrb[0].mxu0
        %v1537 = vadd.f32 %v1413, %v1536
        %v1538 = vpop.f32.mrb[0].mxu0
        %1539 = vmatprep.mubr.f32.mxu0 %v1356
        %1540 = vmatmul.mubr.f32.gmra.mrb[0].mxu0 %v1112
        %v1541 = vpop.f32.mrb[0].mxu0
        %v1542 = vadd.f32 %v1413, %v1541
        %v1543 = vpop.f32.mrb[0].mxu0
        %1544 = vmatprep.mubr.f32.mxu0 %v1357
        %1545 = vmatmul.mubr.f32.gmra.mrb[0].mxu0 %v1114
        %v1546 = vpop.f32.mrb[0].mxu0
        %v1547 = vadd.f32 %v1413, %v1546
        %v1548 = vpop.f32.mrb[0].mxu0
        %1549 = vmatprep.mubr.f32.mxu0 %v1358
        %1550 = vmatmul.mubr.f32.gmra.mrb[0].mxu0 %v1116
        %v1551 = vpop.f32.mrb[0].mxu0
        %v1552 = vadd.f32 %v1413, %v1551
        %v1553 = vpop.f32.mrb[0].mxu0
        %1554 = vmatprep.mubr.f32.mxu0 %v1359
        %1555 = vmatmul.mubr.f32.gmra.mrb[0].mxu0 %v1118
        %v1556 = vpop.f32.mrb[0].mxu0
        %v1557 = vadd.f32 %v1413, %v1556
        %v1558 = vpop.f32.mrb[0].mxu0
        %1559 = vmatprep.mubr.f32.mxu0 %v1360
        %1560 = vmatmul.mubr.f32.gmra.mrb[0].mxu0 %v1120
        %v1561 = vpop.f32.mrb[0].mxu0
        %v1562 = vadd.f32 %v1413, %v1561
        %v1563 = vpop.f32.mrb[0].mxu0
        %1564 = vmatprep.mubr.f32.mxu0 %v1361
        %1565 = vmatmul.mubr.f32.gmra.mrb[0].mxu0 %v1122
        %v1566 = vpop.f32.mrb[0].mxu0
        %v1567 = vadd.f32 %v1413, %v1566
        %v1568 = vpop.f32.mrb[0].mxu0
        %1569 = vmatprep.mubr.f32.mxu0 %v1362
        %1570 = vmatmul.mubr.f32.gmra.mrb[0].mxu0 %v1124
        %v1571 = vpop.f32.mrb[0].mxu0
        %v1572 = vadd.f32 %v1413, %v1571
        %v1573 = vpop.f32.mrb[0].mxu0
        %1574 = vmatprep.mubr.f32.mxu0 %v1363
        %1575 = vmatmul.mubr.f32.gmra.mrb[0].mxu0 %v1126
        %v1576 = vpop.f32.mrb[0].mxu0
        %v1577 = vadd.f32 %v1413, %v1576
        %v1578 = vpop.f32.mrb[0].mxu0
        %1579 = vmatprep.mubr.f32.mxu0 %v1364
        %1580 = vmatmul.mubr.f32.gmra.mrb[0].mxu0 %v1128
        %v1581 = vpop.f32.mrb[0].mxu0
        %v1582 = vadd.f32 %v1413, %v1581
        %v1583 = vpop.f32.mrb[0].mxu0
        %1584 = vmatprep.mubr.f32.mxu0 %v1365
        %1585 = vmatmul.mubr.f32.gmra.mrb[0].mxu0 %v1130
        %v1586 = vpop.f32.mrb[0].mxu0
        %v1587 = vadd.f32 %v1413, %v1586
        %v1588 = vpop.f32.mrb[0].mxu0
        %1589 = vmatprep.mubr.f32.mxu0 %v1366
        %1590 = vmatmul.mubr.f32.gmra.mrb[0].mxu0 %v1132
        %v1591 = vpop.f32.mrb[0].mxu0
        %v1592 = vadd.f32 %v1413, %v1591
        %v1593 = vpop.f32.mrb[0].mxu0
        %1594 = vmatprep.mubr.f32.mxu0 %v1367
        %1595 = vmatmul.mubr.f32.gmra.mrb[0].mxu0 %v1134
        %v1596 = vpop.f32.mrb[0].mxu0
        %v1597 = vadd.f32 %v1413, %v1596
        %v1598 = vpop.f32.mrb[0].mxu0
        %1599 = vmatprep.mubr.f32.mxu0 %v1368
        %1600 = vmatmul.mubr.f32.gmra.mrb[0].mxu0 %v1136
        %v1601 = vpop.f32.mrb[0].mxu0
        %v1602 = vadd.f32 %v1413, %v1601
        %v1603 = vpop.f32.mrb[0].mxu0
        %1604 = vmatprep.mubr.f32.mxu0 %v1369
        %1605 = vmatmul.mubr.f32.gmra.mrb[0].mxu0 %v1138
        %v1606 = vpop.f32.mrb[0].mxu0
        %v1607 = vadd.f32 %v1413, %v1606
        %v1608 = vpop.f32.mrb[0].mxu0
        %1609 = vmatprep.mubr.f32.mxu0 %v1370
        %1610 = vmatmul.mubr.f32.gmra.mrb[0].mxu0 %v1140
        %v1611 = vpop.f32.mrb[0].mxu0
        %v1612 = vadd.f32 %v1413, %v1611
        %v1613 = vpop.f32.mrb[0].mxu0
        %1614 = vmatprep.mubr.f32.mxu0 %v1371
        %1615 = vmatmul.mubr.f32.gmra.mrb[0].mxu0 %v1142
        %v1616 = vpop.f32.mrb[0].mxu0
        %v1617 = vadd.f32 %v1413, %v1616
        %v1618 = vpop.f32.mrb[0].mxu0
        %1619 = vmatprep.mubr.f32.mxu0 %v1372
        %1620 = vmatmul.mubr.f32.gmra.mrb[0].mxu0 %v1144
        %v1621 = vpop.f32.mrb[0].mxu0
        %v1622 = vadd.f32 %v1413, %v1621
        %v1623 = vpop.f32.mrb[0].mxu0
        %1624 = vmatprep.mubr.f32.mxu0 %v1373
        %1625 = vmatmul.mubr.f32.gmra.mrb[0].mxu0 %v1146
        %v1626 = vpop.f32.mrb[0].mxu0
        %v1627 = vadd.f32 %v1413, %v1626
        %v1628 = vpop.f32.mrb[0].mxu0
        %1629 = vmatprep.mubr.f32.mxu0 %v1374
        %1630 = vmatmul.mubr.f32.gmra.mrb[0].mxu0 %v1148
        %v1631 = vpop.f32.mrb[0].mxu0
        %v1632 = vadd.f32 %v1413, %v1631
        %v1633 = vpop.f32.mrb[0].mxu0
        %1634 = vmatprep.mubr.f32.mxu0 %v1375
        %1635 = vmatmul.mubr.f32.gmra.mrb[0].mxu0 %v1150
        %v1636 = vpop.f32.mrb[0].mxu0
        %v1637 = vadd.f32 %v1413, %v1636
        %v1638 = vpop.f32.mrb[0].mxu0
        %1639 = vdwg.mxu0
        %v1640 = vld [vmem:[%s7] sm:$0x1]
        %1642 = vset.pattern.permute.xlu0 0
        %1643 = vperm.xlu0 %1642, %v455
        %v1644 = vpop.permute.xlu0 %1643
        %1647 = vset.pattern.permute.xlu0 0
        %1648 = vperm.xlu0 %1647, %v456
        %v1649 = vpop.permute.xlu0 %1648
        %1652 = vset.pattern.permute.xlu0 0
        %1653 = vperm.xlu0 %1652, %v457
        %v1654 = vpop.permute.xlu0 %1653
        %1657 = vset.pattern.permute.xlu0 0
        %1658 = vperm.xlu0 %1657, %v458
        %v1659 = vpop.permute.xlu0 %1658
        %1662 = vset.pattern.permute.xlu0 0
        %1663 = vperm.xlu0 %1662, %v459
        %v1664 = vpop.permute.xlu0 %1663
        %1667 = vset.pattern.permute.xlu0 0
        %1668 = vperm.xlu0 %1667, %v460
        %v1669 = vpop.permute.xlu0 %1668
        %1672 = vset.pattern.permute.xlu0 0
        %1673 = vperm.xlu0 %1672, %v461
        %v1674 = vpop.permute.xlu0 %1673
        %1677 = vset.pattern.permute.xlu0 0
        %1678 = vperm.xlu0 %1677, %v462
        %v1679 = vpop.permute.xlu0 %1678
        %1682 = vset.pattern.permute.xlu0 0
        %1683 = vperm.xlu0 %1682, %v463
        %v1684 = vpop.permute.xlu0 %1683
        %1687 = vset.pattern.permute.xlu0 0
        %1688 = vperm.xlu0 %1687, %v464
        %v1689 = vpop.permute.xlu0 %1688
        %1692 = vset.pattern.permute.xlu0 0
        %1693 = vperm.xlu0 %1692, %v465
        %v1694 = vpop.permute.xlu0 %1693
        %1697 = vset.pattern.permute.xlu0 0
        %1698 = vperm.xlu0 %1697, %v466
        %v1699 = vpop.permute.xlu0 %1698
        %1702 = vset.pattern.permute.xlu0 0
        %1703 = vperm.xlu0 %1702, %v467
        %v1704 = vpop.permute.xlu0 %1703
        %1707 = vset.pattern.permute.xlu0 0
        %1708 = vperm.xlu0 %1707, %v468
        %v1709 = vpop.permute.xlu0 %1708
        %1712 = vset.pattern.permute.xlu0 0
        %1713 = vperm.xlu0 %1712, %v469
        %v1714 = vpop.permute.xlu0 %1713
        %1717 = vset.pattern.permute.xlu0 0
        %1718 = vperm.xlu0 %1717, %v470
        %v1719 = vpop.permute.xlu0 %1718
        %1722 = vset.pattern.permute.xlu0 0
        %1723 = vperm.xlu0 %1722, %v471
        %v1724 = vpop.permute.xlu0 %1723
        %1727 = vset.pattern.permute.xlu0 0
        %1728 = vperm.xlu0 %1727, %v472
        %v1729 = vpop.permute.xlu0 %1728
        %1732 = vset.pattern.permute.xlu0 0
        %1733 = vperm.xlu0 %1732, %v473
        %v1734 = vpop.permute.xlu0 %1733
        %1737 = vset.pattern.permute.xlu0 0
        %1738 = vperm.xlu0 %1737, %v474
        %v1739 = vpop.permute.xlu0 %1738
        %1742 = vset.pattern.permute.xlu0 0
        %1743 = vperm.xlu0 %1742, %v475
        %v1744 = vpop.permute.xlu0 %1743
        %1747 = vset.pattern.permute.xlu0 0
        %1748 = vperm.xlu0 %1747, %v476
        %v1749 = vpop.permute.xlu0 %1748
        %1752 = vset.pattern.permute.xlu0 0
        %1753 = vperm.xlu0 %1752, %v477
        %v1754 = vpop.permute.xlu0 %1753
        %1757 = vset.pattern.permute.xlu0 0
        %1758 = vperm.xlu0 %1757, %v478
        %v1759 = vpop.permute.xlu0 %1758
        %1762 = vset.pattern.permute.xlu0 0
        %1763 = vperm.xlu0 %1762, %v479
        %v1764 = vpop.permute.xlu0 %1763
        %1767 = vset.pattern.permute.xlu0 0
        %1768 = vperm.xlu0 %1767, %v480
        %v1769 = vpop.permute.xlu0 %1768
        %1772 = vset.pattern.permute.xlu0 0
        %1773 = vperm.xlu0 %1772, %v481
        %v1774 = vpop.permute.xlu0 %1773
        %1777 = vset.pattern.permute.xlu0 0
        %1778 = vperm.xlu0 %1777, %v482
        %v1779 = vpop.permute.xlu0 %1778
        %1782 = vset.pattern.permute.xlu0 0
        %1783 = vperm.xlu0 %1782, %v483
        %v1784 = vpop.permute.xlu0 %1783
        %1787 = vset.pattern.permute.xlu0 0
        %1788 = vperm.xlu0 %1787, %v484
        %v1789 = vpop.permute.xlu0 %1788
        %1792 = vset.pattern.permute.xlu0 0
        %1793 = vperm.xlu0 %1792, %v485
        %v1794 = vpop.permute.xlu0 %1793
        %1797 = vset.pattern.permute.xlu0 0
        %1798 = vperm.xlu0 %1797, %v486
        %v1799 = vpop.permute.xlu0 %1798
        %v1802 = vlaneseq
        %v1803 = vshrl.u32 %v1802, 7
        %v1804 = vsub.s32 0, %v1803
        %v1805 = vrot.slane %v1640, %v1804
        %v1807 = vmul.f32 %v1644, %v1805
        %v1808 = vmul.f32 %v1649, %v1805
        %v1809 = vmul.f32 %v1654, %v1805
        %v1810 = vmul.f32 %v1659, %v1805
        %v1811 = vmul.f32 %v1664, %v1805
        %v1812 = vmul.f32 %v1669, %v1805
        %v1813 = vmul.f32 %v1674, %v1805
        %v1814 = vmul.f32 %v1679, %v1805
        %v1815 = vmul.f32 %v1684, %v1805
        %v1816 = vmul.f32 %v1689, %v1805
        %v1817 = vmul.f32 %v1694, %v1805
        %v1818 = vmul.f32 %v1699, %v1805
        %v1819 = vmul.f32 %v1704, %v1805
        %v1820 = vmul.f32 %v1709, %v1805
        %v1821 = vmul.f32 %v1714, %v1805
        %v1822 = vmul.f32 %v1719, %v1805
        %v1823 = vmul.f32 %v1724, %v1805
        %v1824 = vmul.f32 %v1729, %v1805
        %v1825 = vmul.f32 %v1734, %v1805
        %v1826 = vmul.f32 %v1739, %v1805
        %v1827 = vmul.f32 %v1744, %v1805
        %v1828 = vmul.f32 %v1749, %v1805
        %v1829 = vmul.f32 %v1754, %v1805
        %v1830 = vmul.f32 %v1759, %v1805
        %v1831 = vmul.f32 %v1764, %v1805
        %v1832 = vmul.f32 %v1769, %v1805
        %v1833 = vmul.f32 %v1774, %v1805
        %v1834 = vmul.f32 %v1779, %v1805
        %v1835 = vmul.f32 %v1784, %v1805
        %v1836 = vmul.f32 %v1789, %v1805
        %v1837 = vmul.f32 %v1794, %v1805
        %v1838 = vmul.f32 %v1799, %v1805
        %v1839 = vsub.f32 %v1482, %v1807
        %v1840 = vsub.f32 %v1487, %v1808
        %v1841 = vsub.f32 %v1492, %v1809
        %v1842 = vsub.f32 %v1497, %v1810
        %v1843 = vsub.f32 %v1502, %v1811
        %v1844 = vsub.f32 %v1507, %v1812
        %v1845 = vsub.f32 %v1512, %v1813
        %v1846 = vsub.f32 %v1517, %v1814
        %v1847 = vsub.f32 %v1522, %v1815
        %v1848 = vsub.f32 %v1527, %v1816
        %v1849 = vsub.f32 %v1532, %v1817
        %v1850 = vsub.f32 %v1537, %v1818
        %v1851 = vsub.f32 %v1542, %v1819
        %v1852 = vsub.f32 %v1547, %v1820
        %v1853 = vsub.f32 %v1552, %v1821
        %v1854 = vsub.f32 %v1557, %v1822
        %v1855 = vsub.f32 %v1562, %v1823
        %v1856 = vsub.f32 %v1567, %v1824
        %v1857 = vsub.f32 %v1572, %v1825
        %v1858 = vsub.f32 %v1577, %v1826
        %v1859 = vsub.f32 %v1582, %v1827
        %v1860 = vsub.f32 %v1587, %v1828
        %v1861 = vsub.f32 %v1592, %v1829
        %v1862 = vsub.f32 %v1597, %v1830
        %v1863 = vsub.f32 %v1602, %v1831
        %v1864 = vsub.f32 %v1607, %v1832
        %v1865 = vsub.f32 %v1612, %v1833
        %v1866 = vsub.f32 %v1617, %v1834
        %v1867 = vsub.f32 %v1622, %v1835
        %v1868 = vsub.f32 %v1627, %v1836
        %v1869 = vsub.f32 %v1632, %v1837
        %v1870 = vsub.f32 %v1637, %v1838
        %1871 = vst [vmem:[%s345] sm:$0xff] %v1839
        %1872 = vst [vmem:[%s345 + $0x8] sm:$0xff] %v1840
        %1873 = vst [vmem:[%s345 + $0x10] sm:$0xff] %v1841
        %1874 = vst [vmem:[%s345 + $0x18] sm:$0xff] %v1842
        %1875 = vst [vmem:[%s345 + $0x20] sm:$0xff] %v1843
        %1876 = vst [vmem:[%s345 + $0x28] sm:$0xff] %v1844
        %1877 = vst [vmem:[%s345 + $0x30] sm:$0xff] %v1845
        %1878 = vst [vmem:[%s345 + $0x38] sm:$0xff] %v1846
        %1879 = vst [vmem:[%s345 + $0x40] sm:$0xff] %v1847
        %1880 = vst [vmem:[%s345 + $0x48] sm:$0xff] %v1848
        %1881 = vst [vmem:[%s345 + $0x50] sm:$0xff] %v1849
        %1882 = vst [vmem:[%s345 + $0x58] sm:$0xff] %v1850
        %1883 = vst [vmem:[%s345 + $0x60] sm:$0xff] %v1851
        %1884 = vst [vmem:[%s345 + $0x68] sm:$0xff] %v1852
        %1885 = vst [vmem:[%s345 + $0x70] sm:$0xff] %v1853
        %1886 = vst [vmem:[%s345 + $0x78] sm:$0xff] %v1854
        %1887 = vst [vmem:[%s345 + $0x80] sm:$0xff] %v1855
        %1888 = vst [vmem:[%s345 + $0x88] sm:$0xff] %v1856
        %1889 = vst [vmem:[%s345 + $0x90] sm:$0xff] %v1857
        %1890 = vst [vmem:[%s345 + $0x98] sm:$0xff] %v1858
        %1891 = vst [vmem:[%s345 + $0xa0] sm:$0xff] %v1859
        %1892 = vst [vmem:[%s345 + $0xa8] sm:$0xff] %v1860
        %1893 = vst [vmem:[%s345 + $0xb0] sm:$0xff] %v1861
        %1894 = vst [vmem:[%s345 + $0xb8] sm:$0xff] %v1862
        %1895 = vst [vmem:[%s345 + $0xc0] sm:$0xff] %v1863
        %1896 = vst [vmem:[%s345 + $0xc8] sm:$0xff] %v1864
        %1897 = vst [vmem:[%s345 + $0xd0] sm:$0xff] %v1865
        %1898 = vst [vmem:[%s345 + $0xd8] sm:$0xff] %v1866
        %1899 = vst [vmem:[%s345 + $0xe0] sm:$0xff] %v1867
        %1900 = vst [vmem:[%s345 + $0xe8] sm:$0xff] %v1868
        %1901 = vst [vmem:[%s345 + $0xf0] sm:$0xff] %v1869
        %1902 = vst [vmem:[%s345 + $0xf8] sm:$0xff] %v1870
        %s1903 = sand.u32 %s210, 1
        %s1904 = scalar_lea.sflag [#allocation4], %s1903
        %s1905 = sand.u32 %s210, 1
        %s1906 = smul.addr %s1905, 256
        %s1907 = scalar_lea.vmem [#allocation7], %s1906
        // Predicated region
        $region61: #{tpu_custom_call.1} parent=51 // pred_check
          %p1908 = pneg %p220
        $region62: #{tpu_custom_call.1} parent=51 // pred_check_branch
          %1910 = sbr.rel (%p1908) target = $region64
        $region63: #{tpu_custom_call.1} parent=51 // pred_region
          %s1911 = smul.u32 32, %s24
          %s1913 = ssub.s32 4096, 4096
          %1914 = vsyncadd %s1904, %s1913
          %s1915 = smul.addr %s1911, 128
          %s1916 = scalar_lea.hbm %s8, %s1915
          %s1917 = sshll.u32 %s1907, 4
          %s1918 = int_to_ptr.vmem [resolvable:$true] %s1917
          %1923 = dma.vmem_to_hbm [thread:$0]  %s1918, 4096, %s1916, %s1904, 128, 128, 8
        $region64: #{tpu_custom_call.1} parent=51 // pred_fallthru
          _
      $region52: #{tpu_custom_call.1} parent=5 // pred_fallthru
        _
      %p1924 = scmp.le.s32.totalorder 2, %s19
      // Predicated region
      $region65: #{tpu_custom_call.1} parent=5 // pred_check
        %p1925 = pneg %p1924
      $region66: #{tpu_custom_call.1} parent=5 // pred_check_branch
        %1927 = sbr.rel (%p1925) target = $region68
      $region67: #{tpu_custom_call.1} parent=5 // pred_region
        %s1928 = ssub.s32 %s19, 2
        // Predicated region
        $region69: #{tpu_custom_call.1} parent=67 // pred_check
          %p1929 = pneg %p226
        $region70: #{tpu_custom_call.1} parent=67 // pred_check_branch
          %1931 = sbr.rel (%p1929) target = $region72
        $region71: #{tpu_custom_call.1} parent=67 // pred_region
          %s1932 = sand.u32 %s211, 1
          %s1933 = scalar_lea.sflag [#allocation4], %s1932
          %s1934 = sand.u32 %s211, 1
          %s1935 = smul.addr %s1934, 256
          %s1936 = scalar_lea.vmem [#allocation7], %s1935
          %1937 = dma.done %s1933, 4096
        $region72: #{tpu_custom_call.1} parent=67 // pred_fallthru
          _
      $region68: #{tpu_custom_call.1} parent=5 // pred_fallthru
        _
    $region6: #{tpu_custom_call.1} parent=1 // loop_footer
      %s23 = sadd.s32 1, %s19
    $region7: #{tpu_custom_call.1} parent=1 // loop_footer_branch
      %18 = sbr.rel target = $region3
    $region8: #{tpu_custom_call.1} parent=1 // loop_exit
      _
    %1938 = vsyncpa [#allocation3], 1
    %s1939 = scalar_lea.sflag [#allocation3], 1
    %1940 = vsyncpa %s1939, 1
    %1941 = vsyncpa [#allocation6], 1
    %1942 = vsyncpa [#allocation4], 1
    %s1943 = scalar_lea.sflag [#allocation4], 1
    %1944 = vsyncpa %s1943, 1

</llo_original>
